<compile_context>
chip_gen: v6e
topology: v6e:2x2x1
jax: 0.10.0
libtpu: 0.0.40
codegen_flags: <defaults>
</compile_context>

<pallas_src>
import functools

import jax
import jax.numpy as jnp
from jax.experimental import pallas as pl
from jax.experimental.pallas import tpu as pltpu

H1 = 400    # fc1 output features (logical)
H2 = 300    # fc2 output features (logical)
H1P = 512   # fc1 output features, padded to a lane multiple
H2P = 384   # fc2 output features, padded to a lane multiple


def _round_up(x, m):
    return (x + m - 1) // m * m


def critic_kernel(states_ref, actions_ref,
                  w1_ref, b1_ref,
                  w2x_ref, w2a_ref, b2_ref,
                  w3_ref, b3_ref,
                  out_ref):
    # fc1 + ReLU  (bf16 inputs on the MXU, f32 accumulation)
    h1 = jnp.dot(states_ref[...], w1_ref[...],
                 preferred_element_type=jnp.float32) + b1_ref[...]
    h1 = jnp.maximum(h1, 0.0).astype(jnp.bfloat16)

    # fc2 over the (implicit) concat [h1, actions], then ReLU
    h2 = (jnp.dot(h1, w2x_ref[...], preferred_element_type=jnp.float32)
          + jnp.dot(actions_ref[...], w2a_ref[...],
                    preferred_element_type=jnp.float32)
          + b2_ref[...])
    h2 = jnp.maximum(h2, 0.0)

    # fc3 (N=1 value head): VPU multiply + lane reduction, keeps the MXU free.
    out_ref[...] = (jnp.sum(h2 * w3_ref[...], axis=-1, keepdims=True)
                    + b3_ref[...])


@functools.partial(jax.jit, static_argnames=("batch_tile",))
def critic_forward(states, actions, params, batch_tile=256):
    w1t, b1, w2x, w2a, b2, w3r, b3 = params
    B, in_size = states.shape
    A = actions.shape[1]
    A_pad = w2a.shape[0]

    # Batch tiling: big tiles to feed the MXU, padded so every block is full.
    bt = _round_up(min(batch_tile, _round_up(B, 8)), 8)
    Bp = _round_up(B, bt)

    s = states.astype(jnp.bfloat16)
    a = actions.astype(jnp.bfloat16)
    if Bp != B:
        s = jnp.pad(s, ((0, Bp - B), (0, 0)))
        a = jnp.pad(a, ((0, Bp - B), (0, 0)))
    if A_pad != A:
        a = jnp.pad(a, ((0, 0), (0, A_pad - A)))

    grid = (Bp // bt,)

    out = pl.pallas_call(
        critic_kernel,
        out_shape=jax.ShapeDtypeStruct((Bp, 1), jnp.float32),
        grid_spec=pltpu.PrefetchScalarGridSpec(
            num_scalar_prefetch=0,
            grid=grid,
            in_specs=[
                # activations: tiled over the batch
                pl.BlockSpec((bt, in_size), lambda i: (i, 0)),
                pl.BlockSpec((bt, A_pad), lambda i: (i, 0)),
                # parameters: full arrays, constant block for every grid step
                pl.BlockSpec((in_size, H1P), lambda i: (0, 0)),
                pl.BlockSpec((1, H1P), lambda i: (0, 0)),
                pl.BlockSpec((H1P, H2P), lambda i: (0, 0)),
                pl.BlockSpec((A_pad, H2P), lambda i: (0, 0)),
                pl.BlockSpec((1, H2P), lambda i: (0, 0)),
                pl.BlockSpec((1, H2P), lambda i: (0, 0)),
                pl.BlockSpec((1, 1), lambda i: (0, 0)),
            ],
            out_specs=pl.BlockSpec((bt, 1), lambda i: (i, 0)),
        ),
        compiler_params=pltpu.CompilerParams(
            dimension_semantics=("parallel",)),
    )(s, a, w1t, b1, w2x, w2a, b2, w3r, b3)
    return out[:B]


def init_raw_params(key, input_size, action_size):
    """Deterministic init matching the PyTorch module's reset_parameters().

    Note: lecunishUniformInitializer uses weight.size()[0] (== out_features)
    as 'fan_in', so limits are sqrt(1/400) and sqrt(1/300).  Biases keep the
    PyTorch nn.Linear default uniform(+-1/sqrt(in_features)).
    """
    k = jax.random.split(key, 6)

    l1 = (1.0 / H1) ** 0.5
    w1 = jax.random.uniform(k[0], (H1, input_size), jnp.float32, -l1, l1)
    bb1 = (1.0 / input_size) ** 0.5
    b1 = jax.random.uniform(k[1], (H1,), jnp.float32, -bb1, bb1)

    l2 = (1.0 / H2) ** 0.5
    w2 = jax.random.uniform(k[2], (H2, H1 + action_size), jnp.float32, -l2, l2)
    bb2 = (1.0 / (H1 + action_size)) ** 0.5
    b2 = jax.random.uniform(k[3], (H2,), jnp.float32, -bb2, bb2)

    w3 = jax.random.uniform(k[4], (1, H2), jnp.float32, -0.003, 0.003)
    bb3 = (1.0 / H2) ** 0.5
    b3 = jax.random.uniform(k[5], (1,), jnp.float32, -bb3, bb3)

    return (w1, b1, w2, b2, w3, b3)


def prepare_params(raw, action_size):
    """Transpose / split / zero-pad / cast the raw torch-layout weights once.

    fc1 weight -> (in, 512) bf16; fc2 weight split into the state-hidden part
    (512, 384) and the action part (A_pad, 384); fc3 weight kept as a
    (1, 384) f32 row for the VPU head.  All padded entries are zero, so the
    padded columns stay exactly zero through ReLU and never affect outputs.
    """
    w1, b1, w2, b2, w3, b3 = raw
    in_size = w1.shape[1]
    a_pad = _round_up(max(action_size, 1), 128)

    w1t = jnp.zeros((in_size, H1P), jnp.float32).at[:, :H1].set(w1.T)
    b1p = jnp.zeros((1, H1P), jnp.float32).at[:, :H1].set(b1[None, :])

    w2t = w2.T                                         # (400 + A, 300)
    w2x = jnp.zeros((H1P, H2P), jnp.float32).at[:H1, :H2].set(w2t[:H1, :])
    w2a = (jnp.zeros((a_pad, H2P), jnp.float32)
           .at[:action_size, :H2].set(w2t[H1:, :]))
    b2p = jnp.zeros((1, H2P), jnp.float32).at[:, :H2].set(b2[None, :])

    w3r = jnp.zeros((1, H2P), jnp.float32).at[:, :H2].set(w3)
    b3p = jnp.reshape(b3, (1, 1)).astype(jnp.float32)

    return (w1t.astype(jnp.bfloat16), b1p,
            w2x.astype(jnp.bfloat16), w2a.astype(jnp.bfloat16), b2p,
            w3r, b3p)


def reference_forward(states, actions, params):
    """Plain-JAX reference on the same bf16/padded parameters."""
    w1t, b1, w2x, w2a, b2, w3r, b3 = params
    a_pad = w2a.shape[0]
    s = states.astype(jnp.bfloat16)
    a = jnp.pad(actions.astype(jnp.bfloat16),
                ((0, 0), (0, a_pad - actions.shape[1])))
    h1 = jnp.maximum(
        jnp.dot(s, w1t, preferred_element_type=jnp.float32) + b1, 0.0
    ).astype(jnp.bfloat16)
    h2 = jnp.maximum(
        jnp.dot(h1, w2x, preferred_element_type=jnp.float32)
        + jnp.dot(a, w2a, preferred_element_type=jnp.float32) + b2, 0.0)
    return jnp.sum(h2 * w3r, axis=-1, keepdims=True) + b3


if __name__ == "__main__":
    key = jax.random.PRNGKey(0)
    k_params, k_states, k_actions = jax.random.split(key, 3)

    input_size = 32
    action_size = 8

    raw = init_raw_params(k_params, input_size, action_size)
    params = prepare_params(raw, action_size)

    # Test 1: small, tile-aligned batch (single grid step).
    batch = 64
    states = jax.random.normal(k_states, (batch, input_size), jnp.float32)
    actions = jax.random.normal(k_actions, (batch, action_size), jnp.float32)

    out = critic_forward(states, actions, params)            # default tile 256
    out = jax.block_until_ready(out)
    ref = reference_forward(states, actions, params)
    assert out.shape == (batch, 1)
    assert jnp.allclose(out, ref, atol=1e-3, rtol=1e-3), "mismatch (test 1)"

    # Test 2: uneven batch + multi-step grid (exercises batch padding / slice).
    batch2 = 100
    states2 = jax.random.normal(jax.random.PRNGKey(1),
                                (batch2, input_size), jnp.float32)
    actions2 = jax.random.normal(jax.random.PRNGKey(2),
                                 (batch2, action_size), jnp.float32)
    out2 = critic_forward(states2, actions2, params, batch_tile=32)
    out2 = jax.block_until_ready(out2)
    ref2 = reference_forward(states2, actions2, params)
    assert out2.shape == (batch2, 1)
    assert jnp.allclose(out2, ref2, atol=1e-3, rtol=1e-3), "mismatch (test 2)"

    print("KERNEL_OK")
</pallas_src>

<mosaic_0001>
module attributes {stable_mosaic.version = 11 : i64} {
  func.func @critic_kernel(%arg0: i32, %arg1: memref<64x32xbf16, #tpu.memory_space<vmem>>, %arg2: memref<64x128xbf16, #tpu.memory_space<vmem>>, %arg3: memref<32x512xbf16, #tpu.memory_space<vmem>>, %arg4: memref<1x512xf32, #tpu.memory_space<vmem>>, %arg5: memref<512x384xbf16, #tpu.memory_space<vmem>>, %arg6: memref<128x384xbf16, #tpu.memory_space<vmem>>, %arg7: memref<1x384xf32, #tpu.memory_space<vmem>>, %arg8: memref<1x384xf32, #tpu.memory_space<vmem>>, %arg9: memref<1x1xf32, #tpu.memory_space<vmem>>, %arg10: memref<64x1xf32, #tpu.memory_space<vmem>>) attributes {dimension_semantics = [#tpu.dimension_semantics<parallel>], iteration_bounds = array<i64: 1>, scalar_prefetch = 0 : i64, scratch_operands = 0 : i64, tpu.core_type = #tpu.core_type<tc>, window_params = [{transform_indices = @transform_0, window_bounds = array<i64: 64, 32>}, {transform_indices = @transform_1, window_bounds = array<i64: 64, 128>}, {pipeline_mode = #tpu.pipeline_mode<synchronous>, transform_indices = @transform_2, window_bounds = array<i64: 32, 512>}, {pipeline_mode = #tpu.pipeline_mode<synchronous>, transform_indices = @transform_3, window_bounds = array<i64: 1, 512>}, {pipeline_mode = #tpu.pipeline_mode<synchronous>, transform_indices = @transform_4, window_bounds = array<i64: 512, 384>}, {pipeline_mode = #tpu.pipeline_mode<synchronous>, transform_indices = @transform_5, window_bounds = array<i64: 128, 384>}, {pipeline_mode = #tpu.pipeline_mode<synchronous>, transform_indices = @transform_6, window_bounds = array<i64: 1, 384>}, {pipeline_mode = #tpu.pipeline_mode<synchronous>, transform_indices = @transform_7, window_bounds = array<i64: 1, 384>}, {pipeline_mode = #tpu.pipeline_mode<synchronous>, transform_indices = @transform_8, window_bounds = array<i64: 1, 1>}, {transform_indices = @transform_9, window_bounds = array<i64: 64, 1>}]} {
    %c0 = arith.constant 0 : index
    %c0_0 = arith.constant 0 : index
    %0 = vector.load %arg1[%c0, %c0_0] : memref<64x32xbf16, #tpu.memory_space<vmem>>, vector<64x32xbf16>
    %c0_1 = arith.constant 0 : index
    %c0_2 = arith.constant 0 : index
    %1 = vector.load %arg3[%c0_1, %c0_2] : memref<32x512xbf16, #tpu.memory_space<vmem>>, vector<32x512xbf16>
    %cst = arith.constant dense<0.000000e+00> : vector<64x512xf32>
    %2 = tpu.matmul %0, %1, %cst {dimension_numbers = #tpu.dot_dimension_numbers<[1], [0], [0], [1], [0, 0, 1, 1], [], []>} : vector<64x32xbf16>, vector<32x512xbf16>, vector<64x512xf32> -> vector<64x512xf32>
    %c0_3 = arith.constant 0 : index
    %c0_4 = arith.constant 0 : index
    %3 = vector.load %arg4[%c0_3, %c0_4] : memref<1x512xf32, #tpu.memory_space<vmem>>, vector<1x512xf32>
    %4 = vector.broadcast %3 : vector<1x512xf32> to vector<64x512xf32>
    %5 = arith.addf %2, %4 : vector<64x512xf32>
    %cst_5 = arith.constant 0.000000e+00 : f32
    %6 = vector.broadcast %cst_5 : f32 to vector<64x512xf32>
    %7 = arith.maximumf %5, %6 : vector<64x512xf32>
    %8 = arith.truncf %7 : vector<64x512xf32> to vector<64x512xbf16>
    %c0_6 = arith.constant 0 : index
    %c0_7 = arith.constant 0 : index
    %9 = vector.load %arg5[%c0_6, %c0_7] : memref<512x384xbf16, #tpu.memory_space<vmem>>, vector<512x384xbf16>
    %cst_8 = arith.constant dense<0.000000e+00> : vector<64x384xf32>
    %10 = tpu.matmul %8, %9, %cst_8 {dimension_numbers = #tpu.dot_dimension_numbers<[1], [0], [0], [1], [0, 0, 1, 1], [], []>} : vector<64x512xbf16>, vector<512x384xbf16>, vector<64x384xf32> -> vector<64x384xf32>
    %c0_9 = arith.constant 0 : index
    %c0_10 = arith.constant 0 : index
    %11 = vector.load %arg2[%c0_9, %c0_10] : memref<64x128xbf16, #tpu.memory_space<vmem>>, vector<64x128xbf16>
    %c0_11 = arith.constant 0 : index
    %c0_12 = arith.constant 0 : index
    %12 = vector.load %arg6[%c0_11, %c0_12] : memref<128x384xbf16, #tpu.memory_space<vmem>>, vector<128x384xbf16>
    %cst_13 = arith.constant dense<0.000000e+00> : vector<64x384xf32>
    %13 = tpu.matmul %11, %12, %cst_13 {dimension_numbers = #tpu.dot_dimension_numbers<[1], [0], [0], [1], [0, 0, 1, 1], [], []>} : vector<64x128xbf16>, vector<128x384xbf16>, vector<64x384xf32> -> vector<64x384xf32>
    %14 = arith.addf %10, %13 : vector<64x384xf32>
    %c0_14 = arith.constant 0 : index
    %c0_15 = arith.constant 0 : index
    %15 = vector.load %arg7[%c0_14, %c0_15] : memref<1x384xf32, #tpu.memory_space<vmem>>, vector<1x384xf32>
    %16 = vector.broadcast %15 : vector<1x384xf32> to vector<64x384xf32>
    %17 = arith.addf %14, %16 : vector<64x384xf32>
    %cst_16 = arith.constant 0.000000e+00 : f32
    %18 = vector.broadcast %cst_16 : f32 to vector<64x384xf32>
    %19 = arith.maximumf %17, %18 : vector<64x384xf32>
    %c0_17 = arith.constant 0 : index
    %c0_18 = arith.constant 0 : index
    %20 = vector.load %arg8[%c0_17, %c0_18] : memref<1x384xf32, #tpu.memory_space<vmem>>, vector<1x384xf32>
    %21 = vector.broadcast %20 : vector<1x384xf32> to vector<64x384xf32>
    %22 = arith.mulf %19, %21 : vector<64x384xf32>
    %cst_19 = arith.constant dense<0.000000e+00> : vector<64xf32>
    %23 = vector.multi_reduction <add>, %22, %cst_19 [1] : vector<64x384xf32> to vector<64xf32>
    %24 = vector.shape_cast %23 : vector<64xf32> to vector<64x1xf32>
    %c0_20 = arith.constant 0 : index
    %c0_21 = arith.constant 0 : index
    %25 = vector.load %arg9[%c0_20, %c0_21] : memref<1x1xf32, #tpu.memory_space<vmem>>, vector<1x1xf32>
    %26 = vector.broadcast %25 : vector<1x1xf32> to vector<64x1xf32>
    %27 = arith.addf %24, %26 : vector<64x1xf32>
    %c0_22 = arith.constant 0 : index
    %c0_23 = arith.constant 0 : index
    %28 = vector.load %arg10[%c0_22, %c0_23] : memref<64x1xf32, #tpu.memory_space<vmem>>, vector<64x1xf32>
    tpu.vector_store %arg10[%c0_22, %c0_23], %27 {strides = array<i32>} : memref<64x1xf32, #tpu.memory_space<vmem>>, vector<64x1xf32>,
    return
  }
  func.func @transform_0(%arg0: i32) -> (i32, i32) {
    %c0_i32 = arith.constant 0 : i32
    %c0_i32_0 = arith.constant 0 : i32
    return %arg0, %c0_i32 : i32, i32
  }
  func.func @transform_1(%arg0: i32) -> (i32, i32) {
    %c0_i32 = arith.constant 0 : i32
    %c0_i32_0 = arith.constant 0 : i32
    return %arg0, %c0_i32 : i32, i32
  }
  func.func @transform_2(%arg0: i32) -> (i32, i32) {
    %c0_i32 = arith.constant 0 : i32
    %c0_i32_0 = arith.constant 0 : i32
    %c0_i32_1 = arith.constant 0 : i32
    return %c0_i32, %c0_i32_0 : i32, i32
  }
  func.func @transform_3(%arg0: i32) -> (i32, i32) {
    %c0_i32 = arith.constant 0 : i32
    %c0_i32_0 = arith.constant 0 : i32
    %c0_i32_1 = arith.constant 0 : i32
    return %c0_i32, %c0_i32_0 : i32, i32
  }
  func.func @transform_4(%arg0: i32) -> (i32, i32) {
    %c0_i32 = arith.constant 0 : i32
    %c0_i32_0 = arith.constant 0 : i32
    %c0_i32_1 = arith.constant 0 : i32
    return %c0_i32, %c0_i32_0 : i32, i32
  }
  func.func @transform_5(%arg0: i32) -> (i32, i32) {
    %c0_i32 = arith.constant 0 : i32
    %c0_i32_0 = arith.constant 0 : i32
    %c0_i32_1 = arith.constant 0 : i32
    return %c0_i32, %c0_i32_0 : i32, i32
  }
  func.func @transform_6(%arg0: i32) -> (i32, i32) {
    %c0_i32 = arith.constant 0 : i32
    %c0_i32_0 = arith.constant 0 : i32
    %c0_i32_1 = arith.constant 0 : i32
    return %c0_i32, %c0_i32_0 : i32, i32
  }
  func.func @transform_7(%arg0: i32) -> (i32, i32) {
    %c0_i32 = arith.constant 0 : i32
    %c0_i32_0 = arith.constant 0 : i32
    %c0_i32_1 = arith.constant 0 : i32
    return %c0_i32, %c0_i32_0 : i32, i32
  }
  func.func @transform_8(%arg0: i32) -> (i32, i32) {
    %c0_i32 = arith.constant 0 : i32
    %c0_i32_0 = arith.constant 0 : i32
    %c0_i32_1 = arith.constant 0 : i32
    return %c0_i32, %c0_i32_0 : i32, i32
  }
  func.func @transform_9(%arg0: i32) -> (i32, i32) {
    %c0_i32 = arith.constant 0 : i32
    %c0_i32_0 = arith.constant 0 : i32
    return %arg0, %c0_i32 : i32, i32
  }
}

</mosaic_0001>

<llo_original>
// kernel: critic_forward.1
$region0: #{critic_forward.1}
  #allocation0 [shape = 'u32[]', space=smem, size = 0x4, offset = 0x4, fixed_abs, tag = 'smem constant byte address 0x4 - core index']
  #allocation1 [shape = 'u32[144,128]{1,0:T(1,128)}', space=vmem, size = 0x12000, scoped, tag = 'internal scratch']
  #allocation2 [shape = 'f32[1,1]{1,0:T(1,128)S(1)}', space=vmem, size = 0x200, scoped, tag = 'scoped memory for critic_forward.1']
  %s0 = inlined_call_operand.vmem [shape: bf16[64,32], index: 0, kind: input, shape index: {}]
  %s1 = inlined_call_operand.vmem [shape: bf16[64,128], index: 1, kind: input, shape index: {}]
  %s2 = inlined_call_operand.hbm [shape: bf16[32,512], index: 2, kind: input, shape index: {}]
  %s3 = inlined_call_operand.vmem [shape: f32[1,512], index: 3, kind: input, shape index: {}]
  %s4 = inlined_call_operand.hbm [shape: bf16[512,384], index: 4, kind: input, shape index: {}]
  %s5 = inlined_call_operand.vmem [shape: bf16[128,384], index: 5, kind: input, shape index: {}]
  %s6 = inlined_call_operand.vmem [shape: f32[1,384], index: 6, kind: input, shape index: {}]
  %s7 = inlined_call_operand.vmem [shape: f32[1,384], index: 7, kind: input, shape index: {}]
  %s8 = inlined_call_operand.<no memory space> [shape: f32[1,1], index: 8, kind: input, shape index: {}]
  %s9 = inlined_call_operand.vmem [shape: f32[64,1], index: 9, kind: output, shape index: {}]
  %s10 = sld [smem:[#allocation0]]
  $region54: #{critic_forward.1} parent=0
    _
  %s12 = ssub.s32 1, %s10
  %s13 = scalar_select 0, %s12, %s10
  %v14 = vstv %s8
  %15 = vst [vmem:[#allocation2] sm:$0x1] %v14
  $region1: #{critic_forward.1} parent=0
    #allocation3 [shape = 'u8[32768]{0}', space=vmem, size = 0x8000, scoped, tag = 'input window, operand 2, single buffered']
    #allocation4 [shape = 's32[1]{0}', space=sflag, size = 0x4, scoped, tag = 'scoped memory for critic_forward.1']
    #allocation5 [shape = 'u8[393216]{0}', space=vmem, size = 0x60000, scoped, tag = 'input window, operand 4, single buffered']
    #allocation6 [shape = 's32[1]{0}', space=sflag, size = 0x4, scoped, tag = 'scoped memory for critic_forward.1']
    %16 = vsyncpa [#allocation4], 0
    %17 = vsyncpa [#allocation6], 0
    // Predicated region
    $region2: #{critic_forward.1} parent=1 // pred_check
      _
    $region3: #{critic_forward.1} parent=1 // pred_check_branch
      %19 = sbr.rel (0) target = $region5
    $region4: #{critic_forward.1} parent=1 // pred_region
      _
    $region5: #{critic_forward.1} parent=1 // pred_fallthru
      _
    // Predicated region
    $region6: #{critic_forward.1} parent=1 // pred_check
      _
    $region7: #{critic_forward.1} parent=1 // pred_check_branch
      %21 = sbr.rel (0) target = $region9
    $region8: #{critic_forward.1} parent=1 // pred_region
      _
    $region9: #{critic_forward.1} parent=1 // pred_fallthru
      _
    // Predicated region
    $region10: #{critic_forward.1} parent=1 // pred_check
      _
    $region11: #{critic_forward.1} parent=1 // pred_check_branch
      %23 = sbr.rel (0) target = $region13
    $region12: #{critic_forward.1} parent=1 // pred_region
      %s25 = ssub.s32 1024, 1024
      %26 = vsyncadd [#allocation4], %s25
      %s27 = sshll.u32 [#allocation3], 4
      %s28 = int_to_ptr.vmem [resolvable:$true] %s27
      %33 = dma.hbm_to_vmem [thread:$0]  %s2, 1024, %s28, [#allocation4], 256, 256, 16
    $region13: #{critic_forward.1} parent=1 // pred_fallthru
      _
    // Predicated region
    $region14: #{critic_forward.1} parent=1 // pred_check
      _
    $region15: #{critic_forward.1} parent=1 // pred_check_branch
      %35 = sbr.rel (0) target = $region17
    $region16: #{critic_forward.1} parent=1 // pred_region
      _
    $region17: #{critic_forward.1} parent=1 // pred_fallthru
      _
    // Predicated region
    $region18: #{critic_forward.1} parent=1 // pred_check
      _
    $region19: #{critic_forward.1} parent=1 // pred_check_branch
      %37 = sbr.rel (0) target = $region21
    $region20: #{critic_forward.1} parent=1 // pred_region
      %s39 = ssub.s32 12288, 12288
      %40 = vsyncadd [#allocation6], %s39
      %s41 = sshll.u32 [#allocation5], 4
      %s42 = int_to_ptr.vmem [resolvable:$true] %s41
      %47 = dma.hbm_to_vmem [thread:$0]  %s4, 12288, %s42, [#allocation6], 192, 192, 12
    $region21: #{critic_forward.1} parent=1 // pred_fallthru
      _
    // Predicated region
    $region22: #{critic_forward.1} parent=1 // pred_check
      _
    $region23: #{critic_forward.1} parent=1 // pred_check_branch
      %49 = sbr.rel (0) target = $region25
    $region24: #{critic_forward.1} parent=1 // pred_region
      _
    $region25: #{critic_forward.1} parent=1 // pred_fallthru
      _
    // Predicated region
    $region26: #{critic_forward.1} parent=1 // pred_check
      _
    $region27: #{critic_forward.1} parent=1 // pred_check_branch
      %51 = sbr.rel (0) target = $region29
    $region28: #{critic_forward.1} parent=1 // pred_region
      _
    $region29: #{critic_forward.1} parent=1 // pred_fallthru
      _
    // Predicated region
    $region30: #{critic_forward.1} parent=1 // pred_check
      _
    $region31: #{critic_forward.1} parent=1 // pred_check_branch
      %53 = sbr.rel (0) target = $region33
    $region32: #{critic_forward.1} parent=1 // pred_region
      _
    $region33: #{critic_forward.1} parent=1 // pred_fallthru
      _
    // Predicated region
    $region34: #{critic_forward.1} parent=1 // pred_check
      _
    $region35: #{critic_forward.1} parent=1 // pred_check_branch
      %55 = sbr.rel (0) target = $region37
    $region36: #{critic_forward.1} parent=1 // pred_region
      _
    $region37: #{critic_forward.1} parent=1 // pred_fallthru
      _
    // Predicated region
    $region38: #{critic_forward.1} parent=1 // pred_check
      _
    $region39: #{critic_forward.1} parent=1 // pred_check_branch
      %57 = sbr.rel (0) target = $region41
    $region40: #{critic_forward.1} parent=1 // pred_region
      %58 = dma.done [#allocation4], 1024
    $region41: #{critic_forward.1} parent=1 // pred_fallthru
      _
    // Predicated region
    $region42: #{critic_forward.1} parent=1 // pred_check
      _
    $region43: #{critic_forward.1} parent=1 // pred_check_branch
      %60 = sbr.rel (0) target = $region45
    $region44: #{critic_forward.1} parent=1 // pred_region
      %61 = dma.done [#allocation6], 12288
    $region45: #{critic_forward.1} parent=1 // pred_fallthru
      _
    %v63 = vld [vmem:[%s0] sm:$0xf]
    %v64 = vld [vmem:[%s0 + $0x4] sm:$0xf]
    %v65 = vld [vmem:[%s0 + $0x8] sm:$0xf]
    %v66 = vld [vmem:[%s0 + $0xc] sm:$0xf]
    %v67 = vld [vmem:[%s0 + $0x10] sm:$0xf]
    %v68 = vld [vmem:[%s0 + $0x14] sm:$0xf]
    %v69 = vld [vmem:[%s0 + $0x18] sm:$0xf]
    %v70 = vld [vmem:[%s0 + $0x1c] sm:$0xf]
    %v71 = vld [vmem:[#allocation3] sm:$0xff]
    %v72 = vld [vmem:[#allocation3 + $0x8] sm:$0xff]
    %v73 = vld [vmem:[#allocation3 + $0x10] sm:$0xff]
    %v74 = vld [vmem:[#allocation3 + $0x18] sm:$0xff]
    %v75 = vld [vmem:[#allocation3 + $0x20] sm:$0xff]
    %v76 = vld [vmem:[#allocation3 + $0x28] sm:$0xff]
    %v77 = vld [vmem:[#allocation3 + $0x30] sm:$0xff]
    %v78 = vld [vmem:[#allocation3 + $0x38] sm:$0xff]
    %v79 = vld [vmem:[%s3] sm:$0xf]
    %v81 = vlaneseq
    %v82 = vshrl.u32 %v81, 7
    %v83 = vsub.s32 0, %v82
    %v84 = vrot.slane %v79, %v83
    %v85 = vlaneseq
    %v86 = vshrl.u32 %v85, 7
    %v87 = vsub.s32 1, %v86
    %v88 = vrot.slane %v79, %v87
    %v89 = vlaneseq
    %v90 = vshrl.u32 %v89, 7
    %v91 = vsub.s32 2, %v90
    %v92 = vrot.slane %v79, %v91
    %v93 = vlaneseq
    %v94 = vshrl.u32 %v93, 7
    %v95 = vsub.s32 3, %v94
    %v96 = vrot.slane %v79, %v95
    %v109 = vunpack.c.l.b16 %v63
    %v110 = vunpack.c.l.b16 %v64
    %v111 = vunpack.c.l.b16 %v65
    %v112 = vunpack.c.l.b16 %v66
    %v113 = vunpack.c.l.b16 %v67
    %v114 = vunpack.c.l.b16 %v68
    %v115 = vunpack.c.l.b16 %v69
    %v116 = vunpack.c.l.b16 %v70
    %v117 = vpack.c.b16 %v110, %v109
    %v118 = vpack.c.b16 %v112, %v111
    %v119 = vpack.c.b16 %v114, %v113
    %v120 = vpack.c.b16 %v116, %v115
    %v129 = vunpack.c.l.b16 %v71
    %v130 = vunpack.c.h.b16 %v71
    %v131 = vunpack.c.l.b16 %v72
    %v132 = vunpack.c.h.b16 %v72
    %v133 = vunpack.c.l.b16 %v73
    %v134 = vunpack.c.h.b16 %v73
    %v135 = vunpack.c.l.b16 %v74
    %v136 = vunpack.c.h.b16 %v74
    %v137 = vunpack.c.l.b16 %v75
    %v138 = vunpack.c.h.b16 %v75
    %v139 = vunpack.c.l.b16 %v76
    %v140 = vunpack.c.h.b16 %v76
    %v141 = vunpack.c.l.b16 %v77
    %v142 = vunpack.c.h.b16 %v77
    %v143 = vunpack.c.l.b16 %v78
    %v144 = vunpack.c.h.b16 %v78
    %v145 = vpack.c.b16 %v133, %v129
    %v146 = vpack.c.b16 %v134, %v130
    %v147 = vpack.c.b16 %v135, %v131
    %v148 = vpack.c.b16 %v136, %v132
    %v149 = vpack.c.b16 %v141, %v137
    %v150 = vpack.c.b16 %v142, %v138
    %v151 = vpack.c.b16 %v143, %v139
    %v152 = vpack.c.b16 %v144, %v140
    %vm161 = vcmask 261120
    %v163 = vsel %vm161, %v117, 0
    %v166 = vsel %vm161, %v118, 0
    %v169 = vsel %vm161, %v119, 0
    %v172 = vsel %vm161, %v120, 0
    %174 = vmatprep.subr.bf16.mxu0 0
    %175 = vmatpush1.bf16.msra.mxu0 0
    %176 = vmatprep.subr.bf16.mxu0 0
    %177 = vmatpush1.bf16.msra.mxu0 0
    %178 = vmatprep.subr.bf16.mxu0 0
    %179 = vmatpush1.bf16.msra.mxu0 0
    %180 = vmatprep.subr.bf16.mxu0 0
    %181 = vmatpush1.bf16.msra.mxu0 0
    %182 = vmatprep.subr.bf16.mxu0 0
    %183 = vmatpush1.bf16.msra.mxu0 0
    %184 = vmatprep.subr.bf16.mxu0 0
    %185 = vmatpush1.bf16.msra.mxu0 0
    %186 = vmatprep.subr.bf16.mxu0 %v150
    %187 = vmatpush1.bf16.msra.mxu0 %v149
    %188 = vmatprep.subr.bf16.mxu0 %v146
    %189 = vmatpush1.bf16.msra.mxu0 %v145
    %190 = vmatprep.subr.bf16.mxu0 0
    %191 = vmatpush2.bf16.msra.mxu0 0
    %192 = vmatprep.subr.bf16.mxu0 0
    %193 = vmatpush2.bf16.msra.mxu0 0
    %194 = vmatprep.subr.bf16.mxu0 0
    %195 = vmatpush2.bf16.msra.mxu0 0
    %196 = vmatprep.subr.bf16.mxu0 0
    %197 = vmatpush2.bf16.msra.mxu0 0
    %198 = vmatprep.subr.bf16.mxu0 0
    %199 = vmatpush2.bf16.msra.mxu0 0
    %200 = vmatprep.subr.bf16.mxu0 0
    %201 = vmatpush2.bf16.msra.mxu0 0
    %202 = vmatprep.subr.bf16.mxu0 0
    %203 = vmatpush2.bf16.msra.mxu0 0
    %204 = vmatprep.subr.bf16.mxu0 0
    %205 = vmatpush2.bf16.msra.mxu0 0
    %206 = vmatprep.mubr.bf16.mxu0 0
    %207 = vmatmul.mubr.bf16.gmra.mxu0 %v163
    %v208 = vpop.f32.mrf.mxu0
    %v209 = vadd.f32 %v84, %v208
    %v210 = vpop.f32.mrf.mxu0
    %v211 = vadd.f32 %v88, %v210
    %v212 = vpop.f32.mrf.mxu0
    %v213 = vadd.f32 %v84, %v212
    %v214 = vpop.f32.mrf.mxu0
    %v215 = vadd.f32 %v88, %v214
    %216 = vmatprep.mubr.bf16.mxu0 0
    %217 = vmatmul.mubr.bf16.gmra.mxu0 %v166
    %v218 = vpop.f32.mrf.mxu0
    %v219 = vadd.f32 %v84, %v218
    %v220 = vpop.f32.mrf.mxu0
    %v221 = vadd.f32 %v88, %v220
    %v222 = vpop.f32.mrf.mxu0
    %v223 = vadd.f32 %v84, %v222
    %v224 = vpop.f32.mrf.mxu0
    %v225 = vadd.f32 %v88, %v224
    %226 = vmatprep.mubr.bf16.mxu0 0
    %227 = vmatmul.mubr.bf16.gmra.mxu0 %v169
    %v228 = vpop.f32.mrf.mxu0
    %v229 = vadd.f32 %v84, %v228
    %v230 = vpop.f32.mrf.mxu0
    %v231 = vadd.f32 %v88, %v230
    %v232 = vpop.f32.mrf.mxu0
    %v233 = vadd.f32 %v84, %v232
    %v234 = vpop.f32.mrf.mxu0
    %v235 = vadd.f32 %v88, %v234
    %236 = vmatprep.mubr.bf16.mxu0 0
    %237 = vmatmul.mubr.bf16.gmra.mxu0 %v172
    %v238 = vpop.f32.mrf.mxu0
    %v239 = vadd.f32 %v84, %v238
    %v240 = vpop.f32.mrf.mxu0
    %v241 = vadd.f32 %v88, %v240
    %v242 = vpop.f32.mrf.mxu0
    %v243 = vadd.f32 %v84, %v242
    %v244 = vpop.f32.mrf.mxu0
    %v245 = vadd.f32 %v88, %v244
    %246 = vdwg.mxu0
    %247 = vmatprep.subr.bf16.mxu0 0
    %248 = vmatpush1.bf16.msra.mxu0 0
    %249 = vmatprep.subr.bf16.mxu0 0
    %250 = vmatpush1.bf16.msra.mxu0 0
    %251 = vmatprep.subr.bf16.mxu0 0
    %252 = vmatpush1.bf16.msra.mxu0 0
    %253 = vmatprep.subr.bf16.mxu0 0
    %254 = vmatpush1.bf16.msra.mxu0 0
    %255 = vmatprep.subr.bf16.mxu0 0
    %256 = vmatpush1.bf16.msra.mxu0 0
    %257 = vmatprep.subr.bf16.mxu0 0
    %258 = vmatpush1.bf16.msra.mxu0 0
    %259 = vmatprep.subr.bf16.mxu0 %v152
    %260 = vmatpush1.bf16.msra.mxu0 %v151
    %261 = vmatprep.subr.bf16.mxu0 %v148
    %262 = vmatpush1.bf16.msra.mxu0 %v147
    %263 = vmatprep.subr.bf16.mxu0 0
    %264 = vmatpush2.bf16.msra.mxu0 0
    %265 = vmatprep.subr.bf16.mxu0 0
    %266 = vmatpush2.bf16.msra.mxu0 0
    %267 = vmatprep.subr.bf16.mxu0 0
    %268 = vmatpush2.bf16.msra.mxu0 0
    %269 = vmatprep.subr.bf16.mxu0 0
    %270 = vmatpush2.bf16.msra.mxu0 0
    %271 = vmatprep.subr.bf16.mxu0 0
    %272 = vmatpush2.bf16.msra.mxu0 0
    %273 = vmatprep.subr.bf16.mxu0 0
    %274 = vmatpush2.bf16.msra.mxu0 0
    %275 = vmatprep.subr.bf16.mxu0 0
    %276 = vmatpush2.bf16.msra.mxu0 0
    %277 = vmatprep.subr.bf16.mxu0 0
    %278 = vmatpush2.bf16.msra.mxu0 0
    %279 = vmatprep.mubr.bf16.mxu0 0
    %280 = vmatmul.mubr.bf16.gmra.mxu0 %v163
    %v281 = vpop.f32.mrf.mxu0
    %v282 = vadd.f32 %v92, %v281
    %v283 = vpop.f32.mrf.mxu0
    %v284 = vadd.f32 %v96, %v283
    %v285 = vpop.f32.mrf.mxu0
    %v286 = vadd.f32 %v92, %v285
    %v287 = vpop.f32.mrf.mxu0
    %v288 = vadd.f32 %v96, %v287
    %289 = vmatprep.mubr.bf16.mxu0 0
    %290 = vmatmul.mubr.bf16.gmra.mxu0 %v166
    %v291 = vpop.f32.mrf.mxu0
    %v292 = vadd.f32 %v92, %v291
    %v293 = vpop.f32.mrf.mxu0
    %v294 = vadd.f32 %v96, %v293
    %v295 = vpop.f32.mrf.mxu0
    %v296 = vadd.f32 %v92, %v295
    %v297 = vpop.f32.mrf.mxu0
    %v298 = vadd.f32 %v96, %v297
    %299 = vmatprep.mubr.bf16.mxu0 0
    %300 = vmatmul.mubr.bf16.gmra.mxu0 %v169
    %v301 = vpop.f32.mrf.mxu0
    %v302 = vadd.f32 %v92, %v301
    %v303 = vpop.f32.mrf.mxu0
    %v304 = vadd.f32 %v96, %v303
    %v305 = vpop.f32.mrf.mxu0
    %v306 = vadd.f32 %v92, %v305
    %v307 = vpop.f32.mrf.mxu0
    %v308 = vadd.f32 %v96, %v307
    %309 = vmatprep.mubr.bf16.mxu0 0
    %310 = vmatmul.mubr.bf16.gmra.mxu0 %v172
    %v311 = vpop.f32.mrf.mxu0
    %v312 = vadd.f32 %v92, %v311
    %v313 = vpop.f32.mrf.mxu0
    %v314 = vadd.f32 %v96, %v313
    %v315 = vpop.f32.mrf.mxu0
    %v316 = vadd.f32 %v92, %v315
    %v317 = vpop.f32.mrf.mxu0
    %v318 = vadd.f32 %v96, %v317
    %319 = vdwg.mxu0
    %v320 = vmax.f32 %v209, 0.0
    %v321 = vmax.f32 %v211, 0.0
    %v322 = vmax.f32 %v282, 0.0
    %v323 = vmax.f32 %v284, 0.0
    %v324 = vmax.f32 %v213, 0.0
    %v325 = vmax.f32 %v215, 0.0
    %v326 = vmax.f32 %v286, 0.0
    %v327 = vmax.f32 %v288, 0.0
    %v328 = vmax.f32 %v219, 0.0
    %v329 = vmax.f32 %v221, 0.0
    %v330 = vmax.f32 %v292, 0.0
    %v331 = vmax.f32 %v294, 0.0
    %v332 = vmax.f32 %v223, 0.0
    %v333 = vmax.f32 %v225, 0.0
    %v334 = vmax.f32 %v296, 0.0
    %v335 = vmax.f32 %v298, 0.0
    %v336 = vmax.f32 %v229, 0.0
    %v337 = vmax.f32 %v231, 0.0
    %v338 = vmax.f32 %v302, 0.0
    %v339 = vmax.f32 %v304, 0.0
    %v340 = vmax.f32 %v233, 0.0
    %v341 = vmax.f32 %v235, 0.0
    %v342 = vmax.f32 %v306, 0.0
    %v343 = vmax.f32 %v308, 0.0
    %v344 = vmax.f32 %v239, 0.0
    %v345 = vmax.f32 %v241, 0.0
    %v346 = vmax.f32 %v312, 0.0
    %v347 = vmax.f32 %v314, 0.0
    %v348 = vmax.f32 %v243, 0.0
    %v349 = vmax.f32 %v245, 0.0
    %v350 = vmax.f32 %v316, 0.0
    %v351 = vmax.f32 %v318, 0.0
    %v352 = vpack.c.bf16 %v324, %v320
    %v353 = vpack.c.bf16 %v325, %v321
    %v354 = vpack.c.bf16 %v326, %v322
    %v355 = vpack.c.bf16 %v327, %v323
    %v356 = vpack.c.bf16 %v332, %v328
    %v357 = vpack.c.bf16 %v333, %v329
    %v358 = vpack.c.bf16 %v334, %v330
    %v359 = vpack.c.bf16 %v335, %v331
    %v360 = vpack.c.bf16 %v340, %v336
    %v361 = vpack.c.bf16 %v341, %v337
    %v362 = vpack.c.bf16 %v342, %v338
    %v363 = vpack.c.bf16 %v343, %v339
    %v364 = vpack.c.bf16 %v348, %v344
    %v365 = vpack.c.bf16 %v349, %v345
    %v366 = vpack.c.bf16 %v350, %v346
    %v367 = vpack.c.bf16 %v351, %v347
    %v368 = vld [vmem:[#allocation5] sm:$0xff]
    %v369 = vld [vmem:[#allocation5 + $0x8] sm:$0xf]
    %v370 = vld [vmem:[#allocation5 + $0xc] sm:$0xff]
    %v371 = vld [vmem:[#allocation5 + $0x14] sm:$0xf]
    %v372 = vld [vmem:[#allocation5 + $0x18] sm:$0xff]
    %v373 = vld [vmem:[#allocation5 + $0x20] sm:$0xf]
    %v374 = vld [vmem:[#allocation5 + $0x24] sm:$0xff]
    %v375 = vld [vmem:[#allocation5 + $0x2c] sm:$0xf]
    %v376 = vld [vmem:[#allocation5 + $0x30] sm:$0xff]
    %v377 = vld [vmem:[#allocation5 + $0x38] sm:$0xf]
    %v378 = vld [vmem:[#allocation5 + $0x3c] sm:$0xff]
    %v379 = vld [vmem:[#allocation5 + $0x44] sm:$0xf]
    %v380 = vld [vmem:[#allocation5 + $0x48] sm:$0xff]
    %v381 = vld [vmem:[#allocation5 + $0x50] sm:$0xf]
    %v382 = vld [vmem:[#allocation5 + $0x54] sm:$0xff]
    %v383 = vld [vmem:[#allocation5 + $0x5c] sm:$0xf]
    %v384 = vld [vmem:[#allocation5 + $0x60] sm:$0xff]
    %v385 = vld [vmem:[#allocation5 + $0x68] sm:$0xf]
    %v386 = vld [vmem:[#allocation5 + $0x6c] sm:$0xff]
    %v387 = vld [vmem:[#allocation5 + $0x74] sm:$0xf]
    %v388 = vld [vmem:[#allocation5 + $0x78] sm:$0xff]
    %v389 = vld [vmem:[#allocation5 + $0x80] sm:$0xf]
    %v390 = vld [vmem:[#allocation5 + $0x84] sm:$0xff]
    %v391 = vld [vmem:[#allocation5 + $0x8c] sm:$0xf]
    %v392 = vld [vmem:[#allocation5 + $0x90] sm:$0xff]
    %v393 = vld [vmem:[#allocation5 + $0x98] sm:$0xf]
    %v394 = vld [vmem:[#allocation5 + $0x9c] sm:$0xff]
    %v395 = vld [vmem:[#allocation5 + $0xa4] sm:$0xf]
    %v396 = vld [vmem:[#allocation5 + $0xa8] sm:$0xff]
    %v397 = vld [vmem:[#allocation5 + $0xb0] sm:$0xf]
    %v398 = vld [vmem:[#allocation5 + $0xb4] sm:$0xff]
    %v399 = vld [vmem:[#allocation5 + $0xbc] sm:$0xf]
    %v400 = vld [vmem:[#allocation5 + $0xc0] sm:$0xff]
    %v401 = vld [vmem:[#allocation5 + $0xc8] sm:$0xf]
    %v402 = vld [vmem:[#allocation5 + $0xcc] sm:$0xff]
    %v403 = vld [vmem:[#allocation5 + $0xd4] sm:$0xf]
    %v404 = vld [vmem:[#allocation5 + $0xd8] sm:$0xff]
    %v405 = vld [vmem:[#allocation5 + $0xe0] sm:$0xf]
    %v406 = vld [vmem:[#allocation5 + $0xe4] sm:$0xff]
    %v407 = vld [vmem:[#allocation5 + $0xec] sm:$0xf]
    %v408 = vld [vmem:[#allocation5 + $0xf0] sm:$0xff]
    %v409 = vld [vmem:[#allocation5 + $0xf8] sm:$0xf]
    %v410 = vld [vmem:[#allocation5 + $0xfc] sm:$0xff]
    %v411 = vld [vmem:[#allocation5 + $0x104] sm:$0xf]
    %v412 = vld [vmem:[#allocation5 + $0x108] sm:$0xff]
    %v413 = vld [vmem:[#allocation5 + $0x110] sm:$0xf]
    %v414 = vld [vmem:[#allocation5 + $0x114] sm:$0xff]
    %v415 = vld [vmem:[#allocation5 + $0x11c] sm:$0xf]
    %v416 = vld [vmem:[#allocation5 + $0x120] sm:$0xff]
    %v417 = vld [vmem:[#allocation5 + $0x128] sm:$0xf]
    %v418 = vld [vmem:[#allocation5 + $0x12c] sm:$0xff]
    %v419 = vld [vmem:[#allocation5 + $0x134] sm:$0xf]
    %v420 = vld [vmem:[#allocation5 + $0x138] sm:$0xff]
    %v421 = vld [vmem:[#allocation5 + $0x140] sm:$0xf]
    %v422 = vld [vmem:[#allocation5 + $0x144] sm:$0xff]
    %v423 = vld [vmem:[#allocation5 + $0x14c] sm:$0xf]
    %v424 = vld [vmem:[#allocation5 + $0x150] sm:$0xff]
    %v425 = vld [vmem:[#allocation5 + $0x158] sm:$0xf]
    %v426 = vld [vmem:[#allocation5 + $0x15c] sm:$0xff]
    %v427 = vld [vmem:[#allocation5 + $0x164] sm:$0xf]
    %v428 = vld [vmem:[#allocation5 + $0x168] sm:$0xff]
    %v429 = vld [vmem:[#allocation5 + $0x170] sm:$0xf]
    %v430 = vld [vmem:[#allocation5 + $0x174] sm:$0xff]
    %v431 = vld [vmem:[#allocation5 + $0x17c] sm:$0xf]
    %v432 = vld [vmem:[#allocation5 + $0x180] sm:$0xff]
    %v433 = vld [vmem:[#allocation5 + $0x188] sm:$0xf]
    %v434 = vld [vmem:[#allocation5 + $0x18c] sm:$0xff]
    %v435 = vld [vmem:[#allocation5 + $0x194] sm:$0xf]
    %v436 = vld [vmem:[#allocation5 + $0x198] sm:$0xff]
    %v437 = vld [vmem:[#allocation5 + $0x1a0] sm:$0xf]
    %v438 = vld [vmem:[#allocation5 + $0x1a4] sm:$0xff]
    %v439 = vld [vmem:[#allocation5 + $0x1ac] sm:$0xf]
    %v440 = vld [vmem:[#allocation5 + $0x1b0] sm:$0xff]
    %v441 = vld [vmem:[#allocation5 + $0x1b8] sm:$0xf]
    %v442 = vld [vmem:[#allocation5 + $0x1bc] sm:$0xff]
    %v443 = vld [vmem:[#allocation5 + $0x1c4] sm:$0xf]
    %v444 = vld [vmem:[#allocation5 + $0x1c8] sm:$0xff]
    %v445 = vld [vmem:[#allocation5 + $0x1d0] sm:$0xf]
    %v446 = vld [vmem:[#allocation5 + $0x1d4] sm:$0xff]
    %v447 = vld [vmem:[#allocation5 + $0x1dc] sm:$0xf]
    %v448 = vld [vmem:[#allocation5 + $0x1e0] sm:$0xff]
    %v449 = vld [vmem:[#allocation5 + $0x1e8] sm:$0xf]
    %v450 = vld [vmem:[#allocation5 + $0x1ec] sm:$0xff]
    %v451 = vld [vmem:[#allocation5 + $0x1f4] sm:$0xf]
    %v452 = vld [vmem:[#allocation5 + $0x1f8] sm:$0xff]
    %v453 = vld [vmem:[#allocation5 + $0x200] sm:$0xf]
    %v454 = vld [vmem:[#allocation5 + $0x204] sm:$0xff]
    %v455 = vld [vmem:[#allocation5 + $0x20c] sm:$0xf]
    %v456 = vld [vmem:[#allocation5 + $0x210] sm:$0xff]
    %v457 = vld [vmem:[#allocation5 + $0x218] sm:$0xf]
    %v458 = vld [vmem:[#allocation5 + $0x21c] sm:$0xff]
    %v459 = vld [vmem:[#allocation5 + $0x224] sm:$0xf]
    %v460 = vld [vmem:[#allocation5 + $0x228] sm:$0xff]
    %v461 = vld [vmem:[#allocation5 + $0x230] sm:$0xf]
    %v462 = vld [vmem:[#allocation5 + $0x234] sm:$0xff]
    %v463 = vld [vmem:[#allocation5 + $0x23c] sm:$0xf]
    %v464 = vld [vmem:[#allocation5 + $0x240] sm:$0xff]
    %v465 = vld [vmem:[#allocation5 + $0x248] sm:$0xf]
    %v466 = vld [vmem:[#allocation5 + $0x24c] sm:$0xff]
    %v467 = vld [vmem:[#allocation5 + $0x254] sm:$0xf]
    %v468 = vld [vmem:[#allocation5 + $0x258] sm:$0xff]
    %v469 = vld [vmem:[#allocation5 + $0x260] sm:$0xf]
    %v470 = vld [vmem:[#allocation5 + $0x264] sm:$0xff]
    %v471 = vld [vmem:[#allocation5 + $0x26c] sm:$0xf]
    %v472 = vld [vmem:[#allocation5 + $0x270] sm:$0xff]
    %v473 = vld [vmem:[#allocation5 + $0x278] sm:$0xf]
    %v474 = vld [vmem:[#allocation5 + $0x27c] sm:$0xff]
    %v475 = vld [vmem:[#allocation5 + $0x284] sm:$0xf]
    %v476 = vld [vmem:[#allocation5 + $0x288] sm:$0xff]
    %v477 = vld [vmem:[#allocation5 + $0x290] sm:$0xf]
    %v478 = vld [vmem:[#allocation5 + $0x294] sm:$0xff]
    %v479 = vld [vmem:[#allocation5 + $0x29c] sm:$0xf]
    %v480 = vld [vmem:[#allocation5 + $0x2a0] sm:$0xff]
    %v481 = vld [vmem:[#allocation5 + $0x2a8] sm:$0xf]
    %v482 = vld [vmem:[#allocation5 + $0x2ac] sm:$0xff]
    %v483 = vld [vmem:[#allocation5 + $0x2b4] sm:$0xf]
    %v484 = vld [vmem:[#allocation5 + $0x2b8] sm:$0xff]
    %v485 = vld [vmem:[#allocation5 + $0x2c0] sm:$0xf]
    %v486 = vld [vmem:[#allocation5 + $0x2c4] sm:$0xff]
    %v487 = vld [vmem:[#allocation5 + $0x2cc] sm:$0xf]
    %v488 = vld [vmem:[#allocation5 + $0x2d0] sm:$0xff]
    %v489 = vld [vmem:[#allocation5 + $0x2d8] sm:$0xf]
    %v490 = vld [vmem:[#allocation5 + $0x2dc] sm:$0xff]
    %v491 = vld [vmem:[#allocation5 + $0x2e4] sm:$0xf]
    %v492 = vld [vmem:[#allocation5 + $0x2e8] sm:$0xff]
    %v493 = vld [vmem:[#allocation5 + $0x2f0] sm:$0xf]
    %v494 = vld [vmem:[#allocation5 + $0x2f4] sm:$0xff]
    %v495 = vld [vmem:[#allocation5 + $0x2fc] sm:$0xf]
    %v496 = vld [vmem:[%s1] sm:$0xf]
    %v497 = vld [vmem:[%s1 + $0x4] sm:$0xf]
    %v498 = vld [vmem:[%s1 + $0x8] sm:$0xf]
    %v499 = vld [vmem:[%s1 + $0xc] sm:$0xf]
    %v500 = vld [vmem:[%s1 + $0x10] sm:$0xf]
    %v501 = vld [vmem:[%s1 + $0x14] sm:$0xf]
    %v502 = vld [vmem:[%s1 + $0x18] sm:$0xf]
    %v503 = vld [vmem:[%s1 + $0x1c] sm:$0xf]
    %v504 = vld [vmem:[%s5] sm:$0xff]
    %v505 = vld [vmem:[%s5 + $0x8] sm:$0xf]
    %v506 = vld [vmem:[%s5 + $0xc] sm:$0xff]
    %v507 = vld [vmem:[%s5 + $0x14] sm:$0xf]
    %v508 = vld [vmem:[%s5 + $0x18] sm:$0xff]
    %v509 = vld [vmem:[%s5 + $0x20] sm:$0xf]
    %v510 = vld [vmem:[%s5 + $0x24] sm:$0xff]
    %v511 = vld [vmem:[%s5 + $0x2c] sm:$0xf]
    %v512 = vld [vmem:[%s5 + $0x30] sm:$0xff]
    %v513 = vld [vmem:[%s5 + $0x38] sm:$0xf]
    %v514 = vld [vmem:[%s5 + $0x3c] sm:$0xff]
    %v515 = vld [vmem:[%s5 + $0x44] sm:$0xf]
    %v516 = vld [vmem:[%s5 + $0x48] sm:$0xff]
    %v517 = vld [vmem:[%s5 + $0x50] sm:$0xf]
    %v518 = vld [vmem:[%s5 + $0x54] sm:$0xff]
    %v519 = vld [vmem:[%s5 + $0x5c] sm:$0xf]
    %v520 = vld [vmem:[%s5 + $0x60] sm:$0xff]
    %v521 = vld [vmem:[%s5 + $0x68] sm:$0xf]
    %v522 = vld [vmem:[%s5 + $0x6c] sm:$0xff]
    %v523 = vld [vmem:[%s5 + $0x74] sm:$0xf]
    %v524 = vld [vmem:[%s5 + $0x78] sm:$0xff]
    %v525 = vld [vmem:[%s5 + $0x80] sm:$0xf]
    %v526 = vld [vmem:[%s5 + $0x84] sm:$0xff]
    %v527 = vld [vmem:[%s5 + $0x8c] sm:$0xf]
    %v528 = vld [vmem:[%s5 + $0x90] sm:$0xff]
    %v529 = vld [vmem:[%s5 + $0x98] sm:$0xf]
    %v530 = vld [vmem:[%s5 + $0x9c] sm:$0xff]
    %v531 = vld [vmem:[%s5 + $0xa4] sm:$0xf]
    %v532 = vld [vmem:[%s5 + $0xa8] sm:$0xff]
    %v533 = vld [vmem:[%s5 + $0xb0] sm:$0xf]
    %v534 = vld [vmem:[%s5 + $0xb4] sm:$0xff]
    %v535 = vld [vmem:[%s5 + $0xbc] sm:$0xf]
    %v544 = vunpack.c.l.b16 %v496
    %v545 = vunpack.c.l.b16 %v497
    %v546 = vunpack.c.l.b16 %v498
    %v547 = vunpack.c.l.b16 %v499
    %v548 = vunpack.c.l.b16 %v500
    %v549 = vunpack.c.l.b16 %v501
    %v550 = vunpack.c.l.b16 %v502
    %v551 = vunpack.c.l.b16 %v503
    %v552 = vpack.c.b16 %v545, %v544
    %v553 = vpack.c.b16 %v547, %v546
    %v554 = vpack.c.b16 %v549, %v548
    %v555 = vpack.c.b16 %v551, %v550
    %v592 = vunpack.c.l.b16 %v504
    %v593 = vunpack.c.h.b16 %v504
    %v594 = vunpack.c.l.b16 %v505
    %v595 = vunpack.c.l.b16 %v506
    %v596 = vunpack.c.h.b16 %v506
    %v597 = vunpack.c.l.b16 %v507
    %v598 = vunpack.c.l.b16 %v508
    %v599 = vunpack.c.h.b16 %v508
    %v600 = vunpack.c.l.b16 %v509
    %v601 = vunpack.c.l.b16 %v510
    %v602 = vunpack.c.h.b16 %v510
    %v603 = vunpack.c.l.b16 %v511
    %v604 = vunpack.c.l.b16 %v512
    %v605 = vunpack.c.h.b16 %v512
    %v606 = vunpack.c.l.b16 %v513
    %v607 = vunpack.c.l.b16 %v514
    %v608 = vunpack.c.h.b16 %v514
    %v609 = vunpack.c.l.b16 %v515
    %v610 = vunpack.c.l.b16 %v516
    %v611 = vunpack.c.h.b16 %v516
    %v612 = vunpack.c.l.b16 %v517
    %v613 = vunpack.c.l.b16 %v518
    %v614 = vunpack.c.h.b16 %v518
    %v615 = vunpack.c.l.b16 %v519
    %v616 = vunpack.c.l.b16 %v520
    %v617 = vunpack.c.h.b16 %v520
    %v618 = vunpack.c.l.b16 %v521
    %v619 = vunpack.c.l.b16 %v522
    %v620 = vunpack.c.h.b16 %v522
    %v621 = vunpack.c.l.b16 %v523
    %v622 = vunpack.c.l.b16 %v524
    %v623 = vunpack.c.h.b16 %v524
    %v624 = vunpack.c.l.b16 %v525
    %v625 = vunpack.c.l.b16 %v526
    %v626 = vunpack.c.h.b16 %v526
    %v627 = vunpack.c.l.b16 %v527
    %v628 = vunpack.c.l.b16 %v528
    %v629 = vunpack.c.h.b16 %v528
    %v630 = vunpack.c.l.b16 %v529
    %v631 = vunpack.c.l.b16 %v530
    %v632 = vunpack.c.h.b16 %v530
    %v633 = vunpack.c.l.b16 %v531
    %v634 = vunpack.c.l.b16 %v532
    %v635 = vunpack.c.h.b16 %v532
    %v636 = vunpack.c.l.b16 %v533
    %v637 = vunpack.c.l.b16 %v534
    %v638 = vunpack.c.h.b16 %v534
    %v639 = vunpack.c.l.b16 %v535
    %v640 = vpack.c.b16 %v595, %v592
    %v641 = vpack.c.b16 %v596, %v593
    %v642 = vpack.c.b16 %v597, %v594
    %v643 = vpack.c.b16 %v601, %v598
    %v644 = vpack.c.b16 %v602, %v599
    %v645 = vpack.c.b16 %v603, %v600
    %v646 = vpack.c.b16 %v607, %v604
    %v647 = vpack.c.b16 %v608, %v605
    %v648 = vpack.c.b16 %v609, %v606
    %v649 = vpack.c.b16 %v613, %v610
    %v650 = vpack.c.b16 %v614, %v611
    %v651 = vpack.c.b16 %v615, %v612
    %v652 = vpack.c.b16 %v619, %v616
    %v653 = vpack.c.b16 %v620, %v617
    %v654 = vpack.c.b16 %v621, %v618
    %v655 = vpack.c.b16 %v625, %v622
    %v656 = vpack.c.b16 %v626, %v623
    %v657 = vpack.c.b16 %v627, %v624
    %v658 = vpack.c.b16 %v631, %v628
    %v659 = vpack.c.b16 %v632, %v629
    %v660 = vpack.c.b16 %v633, %v630
    %v661 = vpack.c.b16 %v637, %v634
    %v662 = vpack.c.b16 %v638, %v635
    %v663 = vpack.c.b16 %v639, %v636
    %688 = vmatprep.subr.bf16.mxu0 %v662
    %689 = vmatpush1.bf16.msra.mxu0 %v661
    %690 = vmatprep.subr.bf16.mxu0 %v659
    %691 = vmatpush1.bf16.msra.mxu0 %v658
    %692 = vmatprep.subr.bf16.mxu0 %v656
    %693 = vmatpush1.bf16.msra.mxu0 %v655
    %694 = vmatprep.subr.bf16.mxu0 %v653
    %695 = vmatpush1.bf16.msra.mxu0 %v652
    %696 = vmatprep.subr.bf16.mxu0 %v650
    %697 = vmatpush1.bf16.msra.mxu0 %v649
    %698 = vmatprep.subr.bf16.mxu0 %v647
    %699 = vmatpush1.bf16.msra.mxu0 %v646
    %700 = vmatprep.subr.bf16.mxu0 %v644
    %701 = vmatpush1.bf16.msra.mxu0 %v643
    %702 = vmatprep.subr.bf16.mxu0 %v641
    %703 = vmatpush1.bf16.msra.mxu0 %v640
    %704 = vmatprep.subr.bf16.mxu0 0
    %705 = vmatpush2.bf16.msra.mxu0 0
    %706 = vmatprep.subr.bf16.mxu0 0
    %707 = vmatpush2.bf16.msra.mxu0 0
    %708 = vmatprep.subr.bf16.mxu0 0
    %709 = vmatpush2.bf16.msra.mxu0 0
    %710 = vmatprep.subr.bf16.mxu0 0
    %711 = vmatpush2.bf16.msra.mxu0 0
    %712 = vmatprep.subr.bf16.mxu0 0
    %713 = vmatpush2.bf16.msra.mxu0 0
    %714 = vmatprep.subr.bf16.mxu0 0
    %715 = vmatpush2.bf16.msra.mxu0 0
    %716 = vmatprep.subr.bf16.mxu0 0
    %717 = vmatpush2.bf16.msra.mxu0 0
    %718 = vmatprep.subr.bf16.mxu0 0
    %719 = vmatpush2.bf16.msra.mxu0 0
    %720 = vmatprep.mubr.bf16.mxu0 0
    %721 = vmatmul.mubr.bf16.gmra.mxu0 %v552
    %v722 = vpop.f32.mrf.mxu0
    %v723 = vadd.f32 0.0, %v722
    %v724 = vpop.f32.mrf.mxu0
    %v725 = vadd.f32 0.0, %v724
    %v726 = vpop.f32.mrf.mxu0
    %v727 = vadd.f32 0.0, %v726
    %v728 = vpop.f32.mrf.mxu0
    %v729 = vadd.f32 0.0, %v728
    %730 = vmatprep.mubr.bf16.mxu0 0
    %731 = vmatmul.mubr.bf16.gmra.mxu0 %v553
    %v732 = vpop.f32.mrf.mxu0
    %v733 = vadd.f32 0.0, %v732
    %v734 = vpop.f32.mrf.mxu0
    %v735 = vadd.f32 0.0, %v734
    %v736 = vpop.f32.mrf.mxu0
    %v737 = vadd.f32 0.0, %v736
    %v738 = vpop.f32.mrf.mxu0
    %v739 = vadd.f32 0.0, %v738
    %740 = vmatprep.mubr.bf16.mxu0 0
    %741 = vmatmul.mubr.bf16.gmra.mxu0 %v554
    %v742 = vpop.f32.mrf.mxu0
    %v743 = vadd.f32 0.0, %v742
    %v744 = vpop.f32.mrf.mxu0
    %v745 = vadd.f32 0.0, %v744
    %v746 = vpop.f32.mrf.mxu0
    %v747 = vadd.f32 0.0, %v746
    %v748 = vpop.f32.mrf.mxu0
    %v749 = vadd.f32 0.0, %v748
    %750 = vmatprep.mubr.bf16.mxu0 0
    %751 = vmatmul.mubr.bf16.gmra.mxu0 %v555
    %v752 = vpop.f32.mrf.mxu0
    %v753 = vadd.f32 0.0, %v752
    %v754 = vpop.f32.mrf.mxu0
    %v755 = vadd.f32 0.0, %v754
    %v756 = vpop.f32.mrf.mxu0
    %v757 = vadd.f32 0.0, %v756
    %v758 = vpop.f32.mrf.mxu0
    %v759 = vadd.f32 0.0, %v758
    %760 = vdwg.mxu0
    %761 = vmatprep.subr.bf16.mxu0 0
    %762 = vmatpush1.bf16.msra.mxu0 %v663
    %763 = vmatprep.subr.bf16.mxu0 0
    %764 = vmatpush1.bf16.msra.mxu0 %v660
    %765 = vmatprep.subr.bf16.mxu0 0
    %766 = vmatpush1.bf16.msra.mxu0 %v657
    %767 = vmatprep.subr.bf16.mxu0 0
    %768 = vmatpush1.bf16.msra.mxu0 %v654
    %769 = vmatprep.subr.bf16.mxu0 0
    %770 = vmatpush1.bf16.msra.mxu0 %v651
    %771 = vmatprep.subr.bf16.mxu0 0
    %772 = vmatpush1.bf16.msra.mxu0 %v648
    %773 = vmatprep.subr.bf16.mxu0 0
    %774 = vmatpush1.bf16.msra.mxu0 %v645
    %775 = vmatprep.subr.bf16.mxu0 0
    %776 = vmatpush1.bf16.msra.mxu0 %v642
    %777 = vmatprep.subr.bf16.mxu0 0
    %778 = vmatpush2.bf16.msra.mxu0 0
    %779 = vmatprep.subr.bf16.mxu0 0
    %780 = vmatpush2.bf16.msra.mxu0 0
    %781 = vmatprep.subr.bf16.mxu0 0
    %782 = vmatpush2.bf16.msra.mxu0 0
    %783 = vmatprep.subr.bf16.mxu0 0
    %784 = vmatpush2.bf16.msra.mxu0 0
    %785 = vmatprep.subr.bf16.mxu0 0
    %786 = vmatpush2.bf16.msra.mxu0 0
    %787 = vmatprep.subr.bf16.mxu0 0
    %788 = vmatpush2.bf16.msra.mxu0 0
    %789 = vmatprep.subr.bf16.mxu0 0
    %790 = vmatpush2.bf16.msra.mxu0 0
    %791 = vmatprep.subr.bf16.mxu0 0
    %792 = vmatpush2.bf16.msra.mxu0 0
    %793 = vmatprep.mubr.bf16.mxu0 0
    %794 = vmatmul.mubr.bf16.gmra.mxu0 %v552
    %v795 = vpop.f32.mrf.mxu0
    %v796 = vadd.f32 0.0, %v795
    %v797 = vpop.f32.mrf.mxu0
    %v798 = vpop.f32.mrf.mxu0
    %v799 = vadd.f32 0.0, %v798
    %v800 = vpop.f32.mrf.mxu0
    %801 = vmatprep.mubr.bf16.mxu0 0
    %802 = vmatmul.mubr.bf16.gmra.mxu0 %v553
    %v803 = vpop.f32.mrf.mxu0
    %v804 = vadd.f32 0.0, %v803
    %v805 = vpop.f32.mrf.mxu0
    %v806 = vpop.f32.mrf.mxu0
    %v807 = vadd.f32 0.0, %v806
    %v808 = vpop.f32.mrf.mxu0
    %809 = vmatprep.mubr.bf16.mxu0 0
    %810 = vmatmul.mubr.bf16.gmra.mxu0 %v554
    %v811 = vpop.f32.mrf.mxu0
    %v812 = vadd.f32 0.0, %v811
    %v813 = vpop.f32.mrf.mxu0
    %v814 = vpop.f32.mrf.mxu0
    %v815 = vadd.f32 0.0, %v814
    %v816 = vpop.f32.mrf.mxu0
    %817 = vmatprep.mubr.bf16.mxu0 0
    %818 = vmatmul.mubr.bf16.gmra.mxu0 %v555
    %v819 = vpop.f32.mrf.mxu0
    %v820 = vadd.f32 0.0, %v819
    %v821 = vpop.f32.mrf.mxu0
    %v822 = vpop.f32.mrf.mxu0
    %v823 = vadd.f32 0.0, %v822
    %v824 = vpop.f32.mrf.mxu0
    %825 = vdwg.mxu0
    %v954 = vunpack.c.l.b16 %v368
    %v955 = vunpack.c.h.b16 %v368
    %v956 = vunpack.c.l.b16 %v369
    %v957 = vunpack.c.l.b16 %v370
    %v958 = vunpack.c.h.b16 %v370
    %v959 = vunpack.c.l.b16 %v371
    %v960 = vunpack.c.l.b16 %v372
    %v961 = vunpack.c.h.b16 %v372
    %v962 = vunpack.c.l.b16 %v373
    %v963 = vunpack.c.l.b16 %v374
    %v964 = vunpack.c.h.b16 %v374
    %v965 = vunpack.c.l.b16 %v375
    %v966 = vunpack.c.l.b16 %v376
    %v967 = vunpack.c.h.b16 %v376
    %v968 = vunpack.c.l.b16 %v377
    %v969 = vunpack.c.l.b16 %v378
    %v970 = vunpack.c.h.b16 %v378
    %v971 = vunpack.c.l.b16 %v379
    %v972 = vunpack.c.l.b16 %v380
    %v973 = vunpack.c.h.b16 %v380
    %v974 = vunpack.c.l.b16 %v381
    %v975 = vunpack.c.l.b16 %v382
    %v976 = vunpack.c.h.b16 %v382
    %v977 = vunpack.c.l.b16 %v383
    %v978 = vunpack.c.l.b16 %v384
    %v979 = vunpack.c.h.b16 %v384
    %v980 = vunpack.c.l.b16 %v385
    %v981 = vunpack.c.l.b16 %v386
    %v982 = vunpack.c.h.b16 %v386
    %v983 = vunpack.c.l.b16 %v387
    %v984 = vunpack.c.l.b16 %v388
    %v985 = vunpack.c.h.b16 %v388
    %v986 = vunpack.c.l.b16 %v389
    %v987 = vunpack.c.l.b16 %v390
    %v988 = vunpack.c.h.b16 %v390
    %v989 = vunpack.c.l.b16 %v391
    %v990 = vunpack.c.l.b16 %v392
    %v991 = vunpack.c.h.b16 %v392
    %v992 = vunpack.c.l.b16 %v393
    %v993 = vunpack.c.l.b16 %v394
    %v994 = vunpack.c.h.b16 %v394
    %v995 = vunpack.c.l.b16 %v395
    %v996 = vunpack.c.l.b16 %v396
    %v997 = vunpack.c.h.b16 %v396
    %v998 = vunpack.c.l.b16 %v397
    %v999 = vunpack.c.l.b16 %v398
    %v1000 = vunpack.c.h.b16 %v398
    %v1001 = vunpack.c.l.b16 %v399
    %v1002 = vunpack.c.l.b16 %v400
    %v1003 = vunpack.c.h.b16 %v400
    %v1004 = vunpack.c.l.b16 %v401
    %v1005 = vunpack.c.l.b16 %v402
    %v1006 = vunpack.c.h.b16 %v402
    %v1007 = vunpack.c.l.b16 %v403
    %v1008 = vunpack.c.l.b16 %v404
    %v1009 = vunpack.c.h.b16 %v404
    %v1010 = vunpack.c.l.b16 %v405
    %v1011 = vunpack.c.l.b16 %v406
    %v1012 = vunpack.c.h.b16 %v406
    %v1013 = vunpack.c.l.b16 %v407
    %v1014 = vunpack.c.l.b16 %v408
    %v1015 = vunpack.c.h.b16 %v408
    %v1016 = vunpack.c.l.b16 %v409
    %v1017 = vunpack.c.l.b16 %v410
    %v1018 = vunpack.c.h.b16 %v410
    %v1019 = vunpack.c.l.b16 %v411
    %v1020 = vunpack.c.l.b16 %v412
    %v1021 = vunpack.c.h.b16 %v412
    %v1022 = vunpack.c.l.b16 %v413
    %v1023 = vunpack.c.l.b16 %v414
    %v1024 = vunpack.c.h.b16 %v414
    %v1025 = vunpack.c.l.b16 %v415
    %v1026 = vunpack.c.l.b16 %v416
    %v1027 = vunpack.c.h.b16 %v416
    %v1028 = vunpack.c.l.b16 %v417
    %v1029 = vunpack.c.l.b16 %v418
    %v1030 = vunpack.c.h.b16 %v418
    %v1031 = vunpack.c.l.b16 %v419
    %v1032 = vunpack.c.l.b16 %v420
    %v1033 = vunpack.c.h.b16 %v420
    %v1034 = vunpack.c.l.b16 %v421
    %v1035 = vunpack.c.l.b16 %v422
    %v1036 = vunpack.c.h.b16 %v422
    %v1037 = vunpack.c.l.b16 %v423
    %v1038 = vunpack.c.l.b16 %v424
    %v1039 = vunpack.c.h.b16 %v424
    %v1040 = vunpack.c.l.b16 %v425
    %v1041 = vunpack.c.l.b16 %v426
    %v1042 = vunpack.c.h.b16 %v426
    %v1043 = vunpack.c.l.b16 %v427
    %v1044 = vunpack.c.l.b16 %v428
    %v1045 = vunpack.c.h.b16 %v428
    %v1046 = vunpack.c.l.b16 %v429
    %v1047 = vunpack.c.l.b16 %v430
    %v1048 = vunpack.c.h.b16 %v430
    %v1049 = vunpack.c.l.b16 %v431
    %v1050 = vunpack.c.l.b16 %v432
    %v1051 = vunpack.c.h.b16 %v432
    %v1052 = vunpack.c.l.b16 %v433
    %v1053 = vunpack.c.l.b16 %v434
    %v1054 = vunpack.c.h.b16 %v434
    %v1055 = vunpack.c.l.b16 %v435
    %v1056 = vunpack.c.l.b16 %v436
    %v1057 = vunpack.c.h.b16 %v436
    %v1058 = vunpack.c.l.b16 %v437
    %v1059 = vunpack.c.l.b16 %v438
    %v1060 = vunpack.c.h.b16 %v438
    %v1061 = vunpack.c.l.b16 %v439
    %v1062 = vunpack.c.l.b16 %v440
    %v1063 = vunpack.c.h.b16 %v440
    %v1064 = vunpack.c.l.b16 %v441
    %v1065 = vunpack.c.l.b16 %v442
    %v1066 = vunpack.c.h.b16 %v442
    %v1067 = vunpack.c.l.b16 %v443
    %v1068 = vunpack.c.l.b16 %v444
    %v1069 = vunpack.c.h.b16 %v444
    %v1070 = vunpack.c.l.b16 %v445
    %v1071 = vunpack.c.l.b16 %v446
    %v1072 = vunpack.c.h.b16 %v446
    %v1073 = vunpack.c.l.b16 %v447
    %v1074 = vunpack.c.l.b16 %v448
    %v1075 = vunpack.c.h.b16 %v448
    %v1076 = vunpack.c.l.b16 %v449
    %v1077 = vunpack.c.l.b16 %v450
    %v1078 = vunpack.c.h.b16 %v450
    %v1079 = vunpack.c.l.b16 %v451
    %v1080 = vunpack.c.l.b16 %v452
    %v1081 = vunpack.c.h.b16 %v452
    %v1082 = vunpack.c.l.b16 %v453
    %v1083 = vunpack.c.l.b16 %v454
    %v1084 = vunpack.c.h.b16 %v454
    %v1085 = vunpack.c.l.b16 %v455
    %v1086 = vunpack.c.l.b16 %v456
    %v1087 = vunpack.c.h.b16 %v456
    %v1088 = vunpack.c.l.b16 %v457
    %v1089 = vunpack.c.l.b16 %v458
    %v1090 = vunpack.c.h.b16 %v458
    %v1091 = vunpack.c.l.b16 %v459
    %v1092 = vunpack.c.l.b16 %v460
    %v1093 = vunpack.c.h.b16 %v460
    %v1094 = vunpack.c.l.b16 %v461
    %v1095 = vunpack.c.l.b16 %v462
    %v1096 = vunpack.c.h.b16 %v462
    %v1097 = vunpack.c.l.b16 %v463
    %v1098 = vunpack.c.l.b16 %v464
    %v1099 = vunpack.c.h.b16 %v464
    %v1100 = vunpack.c.l.b16 %v465
    %v1101 = vunpack.c.l.b16 %v466
    %v1102 = vunpack.c.h.b16 %v466
    %v1103 = vunpack.c.l.b16 %v467
    %v1104 = vunpack.c.l.b16 %v468
    %v1105 = vunpack.c.h.b16 %v468
    %v1106 = vunpack.c.l.b16 %v469
    %v1107 = vunpack.c.l.b16 %v470
    %v1108 = vunpack.c.h.b16 %v470
    %v1109 = vunpack.c.l.b16 %v471
    %v1110 = vunpack.c.l.b16 %v472
    %v1111 = vunpack.c.h.b16 %v472
    %v1112 = vunpack.c.l.b16 %v473
    %v1113 = vunpack.c.l.b16 %v474
    %v1114 = vunpack.c.h.b16 %v474
    %v1115 = vunpack.c.l.b16 %v475
    %v1116 = vunpack.c.l.b16 %v476
    %v1117 = vunpack.c.h.b16 %v476
    %v1118 = vunpack.c.l.b16 %v477
    %v1119 = vunpack.c.l.b16 %v478
    %v1120 = vunpack.c.h.b16 %v478
    %v1121 = vunpack.c.l.b16 %v479
    %v1122 = vunpack.c.l.b16 %v480
    %v1123 = vunpack.c.h.b16 %v480
    %v1124 = vunpack.c.l.b16 %v481
    %v1125 = vunpack.c.l.b16 %v482
    %v1126 = vunpack.c.h.b16 %v482
    %v1127 = vunpack.c.l.b16 %v483
    %v1128 = vunpack.c.l.b16 %v484
    %v1129 = vunpack.c.h.b16 %v484
    %v1130 = vunpack.c.l.b16 %v485
    %v1131 = vunpack.c.l.b16 %v486
    %v1132 = vunpack.c.h.b16 %v486
    %v1133 = vunpack.c.l.b16 %v487
    %v1134 = vunpack.c.l.b16 %v488
    %v1135 = vunpack.c.h.b16 %v488
    %v1136 = vunpack.c.l.b16 %v489
    %v1137 = vunpack.c.l.b16 %v490
    %v1138 = vunpack.c.h.b16 %v490
    %v1139 = vunpack.c.l.b16 %v491
    %v1140 = vunpack.c.l.b16 %v492
    %v1141 = vunpack.c.h.b16 %v492
    %v1142 = vunpack.c.l.b16 %v493
    %v1143 = vunpack.c.l.b16 %v494
    %v1144 = vunpack.c.h.b16 %v494
    %v1145 = vunpack.c.l.b16 %v495
    %v1146 = vpack.c.b16 %v957, %v954
    %v1147 = vpack.c.b16 %v958, %v955
    %v1148 = vpack.c.b16 %v959, %v956
    %v1149 = vpack.c.b16 %v963, %v960
    %v1150 = vpack.c.b16 %v964, %v961
    %v1151 = vpack.c.b16 %v965, %v962
    %v1152 = vpack.c.b16 %v969, %v966
    %v1153 = vpack.c.b16 %v970, %v967
    %v1154 = vpack.c.b16 %v971, %v968
    %v1155 = vpack.c.b16 %v975, %v972
    %v1156 = vpack.c.b16 %v976, %v973
    %v1157 = vpack.c.b16 %v977, %v974
    %v1158 = vpack.c.b16 %v981, %v978
    %v1159 = vpack.c.b16 %v982, %v979
    %v1160 = vpack.c.b16 %v983, %v980
    %v1161 = vpack.c.b16 %v987, %v984
    %v1162 = vpack.c.b16 %v988, %v985
    %v1163 = vpack.c.b16 %v989, %v986
    %v1164 = vpack.c.b16 %v993, %v990
    %v1165 = vpack.c.b16 %v994, %v991
    %v1166 = vpack.c.b16 %v995, %v992
    %v1167 = vpack.c.b16 %v999, %v996
    %v1168 = vpack.c.b16 %v1000, %v997
    %v1169 = vpack.c.b16 %v1001, %v998
    %v1170 = vpack.c.b16 %v1005, %v1002
    %v1171 = vpack.c.b16 %v1006, %v1003
    %v1172 = vpack.c.b16 %v1007, %v1004
    %v1173 = vpack.c.b16 %v1011, %v1008
    %v1174 = vpack.c.b16 %v1012, %v1009
    %v1175 = vpack.c.b16 %v1013, %v1010
    %v1176 = vpack.c.b16 %v1017, %v1014
    %v1177 = vpack.c.b16 %v1018, %v1015
    %v1178 = vpack.c.b16 %v1019, %v1016
    %v1179 = vpack.c.b16 %v1023, %v1020
    %v1180 = vpack.c.b16 %v1024, %v1021
    %v1181 = vpack.c.b16 %v1025, %v1022
    %v1182 = vpack.c.b16 %v1029, %v1026
    %v1183 = vpack.c.b16 %v1030, %v1027
    %v1184 = vpack.c.b16 %v1031, %v1028
    %v1185 = vpack.c.b16 %v1035, %v1032
    %v1186 = vpack.c.b16 %v1036, %v1033
    %v1187 = vpack.c.b16 %v1037, %v1034
    %v1188 = vpack.c.b16 %v1041, %v1038
    %v1189 = vpack.c.b16 %v1042, %v1039
    %v1190 = vpack.c.b16 %v1043, %v1040
    %v1191 = vpack.c.b16 %v1047, %v1044
    %v1192 = vpack.c.b16 %v1048, %v1045
    %v1193 = vpack.c.b16 %v1049, %v1046
    %v1194 = vpack.c.b16 %v1053, %v1050
    %v1195 = vpack.c.b16 %v1054, %v1051
    %v1196 = vpack.c.b16 %v1055, %v1052
    %v1197 = vpack.c.b16 %v1059, %v1056
    %v1198 = vpack.c.b16 %v1060, %v1057
    %v1199 = vpack.c.b16 %v1061, %v1058
    %v1200 = vpack.c.b16 %v1065, %v1062
    %v1201 = vpack.c.b16 %v1066, %v1063
    %v1202 = vpack.c.b16 %v1067, %v1064
    %v1203 = vpack.c.b16 %v1071, %v1068
    %v1204 = vpack.c.b16 %v1072, %v1069
    %v1205 = vpack.c.b16 %v1073, %v1070
    %v1206 = vpack.c.b16 %v1077, %v1074
    %v1207 = vpack.c.b16 %v1078, %v1075
    %v1208 = vpack.c.b16 %v1079, %v1076
    %v1209 = vpack.c.b16 %v1083, %v1080
    %v1210 = vpack.c.b16 %v1084, %v1081
    %v1211 = vpack.c.b16 %v1085, %v1082
    %v1212 = vpack.c.b16 %v1089, %v1086
    %v1213 = vpack.c.b16 %v1090, %v1087
    %v1214 = vpack.c.b16 %v1091, %v1088
    %v1215 = vpack.c.b16 %v1095, %v1092
    %v1216 = vpack.c.b16 %v1096, %v1093
    %v1217 = vpack.c.b16 %v1097, %v1094
    %v1218 = vpack.c.b16 %v1101, %v1098
    %v1219 = vpack.c.b16 %v1102, %v1099
    %v1220 = vpack.c.b16 %v1103, %v1100
    %v1221 = vpack.c.b16 %v1107, %v1104
    %v1222 = vpack.c.b16 %v1108, %v1105
    %v1223 = vpack.c.b16 %v1109, %v1106
    %v1224 = vpack.c.b16 %v1113, %v1110
    %v1225 = vpack.c.b16 %v1114, %v1111
    %v1226 = vpack.c.b16 %v1115, %v1112
    %v1227 = vpack.c.b16 %v1119, %v1116
    %v1228 = vpack.c.b16 %v1120, %v1117
    %v1229 = vpack.c.b16 %v1121, %v1118
    %v1230 = vpack.c.b16 %v1125, %v1122
    %v1231 = vpack.c.b16 %v1126, %v1123
    %v1232 = vpack.c.b16 %v1127, %v1124
    %v1233 = vpack.c.b16 %v1131, %v1128
    %v1234 = vpack.c.b16 %v1132, %v1129
    %v1235 = vpack.c.b16 %v1133, %v1130
    %v1236 = vpack.c.b16 %v1137, %v1134
    %v1237 = vpack.c.b16 %v1138, %v1135
    %v1238 = vpack.c.b16 %v1139, %v1136
    %v1239 = vpack.c.b16 %v1143, %v1140
    %v1240 = vpack.c.b16 %v1144, %v1141
    %v1241 = vpack.c.b16 %v1145, %v1142
    %1338 = vmatprep.subr.bf16.mxu0 %v1168
    %1339 = vmatpush1.bf16.msra.mxu0 %v1167
    %1340 = vmatprep.subr.bf16.mxu0 %v1165
    %1341 = vmatpush1.bf16.msra.mxu0 %v1164
    %1342 = vmatprep.subr.bf16.mxu0 %v1162
    %1343 = vmatpush1.bf16.msra.mxu0 %v1161
    %1344 = vmatprep.subr.bf16.mxu0 %v1159
    %1345 = vmatpush1.bf16.msra.mxu0 %v1158
    %1346 = vmatprep.subr.bf16.mxu0 %v1156
    %1347 = vmatpush1.bf16.msra.mxu0 %v1155
    %1348 = vmatprep.subr.bf16.mxu0 %v1153
    %1349 = vmatpush1.bf16.msra.mxu0 %v1152
    %1350 = vmatprep.subr.bf16.mxu0 %v1150
    %1351 = vmatpush1.bf16.msra.mxu0 %v1149
    %1352 = vmatprep.subr.bf16.mxu0 %v1147
    %1353 = vmatpush1.bf16.msra.mxu0 %v1146
    %1354 = vmatprep.subr.bf16.mxu0 %v1192
    %1355 = vmatpush2.bf16.msra.mxu0 %v1191
    %1356 = vmatprep.subr.bf16.mxu0 %v1189
    %1357 = vmatpush2.bf16.msra.mxu0 %v1188
    %1358 = vmatprep.subr.bf16.mxu0 %v1186
    %1359 = vmatpush2.bf16.msra.mxu0 %v1185
    %1360 = vmatprep.subr.bf16.mxu0 %v1183
    %1361 = vmatpush2.bf16.msra.mxu0 %v1182
    %1362 = vmatprep.subr.bf16.mxu0 %v1180
    %1363 = vmatpush2.bf16.msra.mxu0 %v1179
    %1364 = vmatprep.subr.bf16.mxu0 %v1177
    %1365 = vmatpush2.bf16.msra.mxu0 %v1176
    %1366 = vmatprep.subr.bf16.mxu0 %v1174
    %1367 = vmatpush2.bf16.msra.mxu0 %v1173
    %1368 = vmatprep.subr.bf16.mxu0 %v1171
    %1369 = vmatpush2.bf16.msra.mxu0 %v1170
    %1370 = vmatprep.mubr.bf16.mxu0 %v353
    %1371 = vmatmul.mubr.bf16.gmra.mxu0 %v352
    %v1372 = vpop.f32.mrf.mxu0
    %v1373 = vadd.f32 %v723, %v1372
    %v1374 = vpop.f32.mrf.mxu0
    %v1375 = vadd.f32 %v725, %v1374
    %v1376 = vpop.f32.mrf.mxu0
    %v1377 = vadd.f32 %v727, %v1376
    %v1378 = vpop.f32.mrf.mxu0
    %v1379 = vadd.f32 %v729, %v1378
    %1380 = vmatprep.mubr.bf16.mxu0 %v357
    %1381 = vmatmul.mubr.bf16.gmra.mxu0 %v356
    %v1382 = vpop.f32.mrf.mxu0
    %v1383 = vadd.f32 %v733, %v1382
    %v1384 = vpop.f32.mrf.mxu0
    %v1385 = vadd.f32 %v735, %v1384
    %v1386 = vpop.f32.mrf.mxu0
    %v1387 = vadd.f32 %v737, %v1386
    %v1388 = vpop.f32.mrf.mxu0
    %v1389 = vadd.f32 %v739, %v1388
    %1390 = vmatprep.mubr.bf16.mxu0 %v361
    %1391 = vmatmul.mubr.bf16.gmra.mxu0 %v360
    %v1392 = vpop.f32.mrf.mxu0
    %v1393 = vadd.f32 %v743, %v1392
    %v1394 = vpop.f32.mrf.mxu0
    %v1395 = vadd.f32 %v745, %v1394
    %v1396 = vpop.f32.mrf.mxu0
    %v1397 = vadd.f32 %v747, %v1396
    %v1398 = vpop.f32.mrf.mxu0
    %v1399 = vadd.f32 %v749, %v1398
    %1400 = vmatprep.mubr.bf16.mxu0 %v365
    %1401 = vmatmul.mubr.bf16.gmra.mxu0 %v364
    %v1402 = vpop.f32.mrf.mxu0
    %v1403 = vadd.f32 %v753, %v1402
    %v1404 = vpop.f32.mrf.mxu0
    %v1405 = vadd.f32 %v755, %v1404
    %v1406 = vpop.f32.mrf.mxu0
    %v1407 = vadd.f32 %v757, %v1406
    %v1408 = vpop.f32.mrf.mxu0
    %v1409 = vadd.f32 %v759, %v1408
    %1410 = vdwg.mxu0
    %1411 = vmatprep.subr.bf16.mxu0 %v1216
    %1412 = vmatpush1.bf16.msra.mxu0 %v1215
    %1413 = vmatprep.subr.bf16.mxu0 %v1213
    %1414 = vmatpush1.bf16.msra.mxu0 %v1212
    %1415 = vmatprep.subr.bf16.mxu0 %v1210
    %1416 = vmatpush1.bf16.msra.mxu0 %v1209
    %1417 = vmatprep.subr.bf16.mxu0 %v1207
    %1418 = vmatpush1.bf16.msra.mxu0 %v1206
    %1419 = vmatprep.subr.bf16.mxu0 %v1204
    %1420 = vmatpush1.bf16.msra.mxu0 %v1203
    %1421 = vmatprep.subr.bf16.mxu0 %v1201
    %1422 = vmatpush1.bf16.msra.mxu0 %v1200
    %1423 = vmatprep.subr.bf16.mxu0 %v1198
    %1424 = vmatpush1.bf16.msra.mxu0 %v1197
    %1425 = vmatprep.subr.bf16.mxu0 %v1195
    %1426 = vmatpush1.bf16.msra.mxu0 %v1194
    %1427 = vmatprep.subr.bf16.mxu0 %v1240
    %1428 = vmatpush2.bf16.msra.mxu0 %v1239
    %1429 = vmatprep.subr.bf16.mxu0 %v1237
    %1430 = vmatpush2.bf16.msra.mxu0 %v1236
    %1431 = vmatprep.subr.bf16.mxu0 %v1234
    %1432 = vmatpush2.bf16.msra.mxu0 %v1233
    %1433 = vmatprep.subr.bf16.mxu0 %v1231
    %1434 = vmatpush2.bf16.msra.mxu0 %v1230
    %1435 = vmatprep.subr.bf16.mxu0 %v1228
    %1436 = vmatpush2.bf16.msra.mxu0 %v1227
    %1437 = vmatprep.subr.bf16.mxu0 %v1225
    %1438 = vmatpush2.bf16.msra.mxu0 %v1224
    %1439 = vmatprep.subr.bf16.mxu0 %v1222
    %1440 = vmatpush2.bf16.msra.mxu0 %v1221
    %1441 = vmatprep.subr.bf16.mxu0 %v1219
    %1442 = vmatpush2.bf16.msra.mxu0 %v1218
    %1443 = vmatprep.mubr.bf16.mxu0 %v355
    %1444 = vmatmul.mubr.bf16.gmra.mxu0 %v354
    %v1445 = vpop.f32.mrf.mxu0
    %v1446 = vadd.f32 %v1373, %v1445
    %v1447 = vpop.f32.mrf.mxu0
    %v1448 = vadd.f32 %v1375, %v1447
    %v1449 = vpop.f32.mrf.mxu0
    %v1450 = vadd.f32 %v1377, %v1449
    %v1451 = vpop.f32.mrf.mxu0
    %v1452 = vadd.f32 %v1379, %v1451
    %1453 = vmatprep.mubr.bf16.mxu0 %v359
    %1454 = vmatmul.mubr.bf16.gmra.mxu0 %v358
    %v1455 = vpop.f32.mrf.mxu0
    %v1456 = vadd.f32 %v1383, %v1455
    %v1457 = vpop.f32.mrf.mxu0
    %v1458 = vadd.f32 %v1385, %v1457
    %v1459 = vpop.f32.mrf.mxu0
    %v1460 = vadd.f32 %v1387, %v1459
    %v1461 = vpop.f32.mrf.mxu0
    %v1462 = vadd.f32 %v1389, %v1461
    %1463 = vmatprep.mubr.bf16.mxu0 %v363
    %1464 = vmatmul.mubr.bf16.gmra.mxu0 %v362
    %v1465 = vpop.f32.mrf.mxu0
    %v1466 = vadd.f32 %v1393, %v1465
    %v1467 = vpop.f32.mrf.mxu0
    %v1468 = vadd.f32 %v1395, %v1467
    %v1469 = vpop.f32.mrf.mxu0
    %v1470 = vadd.f32 %v1397, %v1469
    %v1471 = vpop.f32.mrf.mxu0
    %v1472 = vadd.f32 %v1399, %v1471
    %1473 = vmatprep.mubr.bf16.mxu0 %v367
    %1474 = vmatmul.mubr.bf16.gmra.mxu0 %v366
    %v1475 = vpop.f32.mrf.mxu0
    %v1476 = vadd.f32 %v1403, %v1475
    %v1477 = vpop.f32.mrf.mxu0
    %v1478 = vadd.f32 %v1405, %v1477
    %v1479 = vpop.f32.mrf.mxu0
    %v1480 = vadd.f32 %v1407, %v1479
    %v1481 = vpop.f32.mrf.mxu0
    %v1482 = vadd.f32 %v1409, %v1481
    %1483 = vdwg.mxu0
    %1484 = vmatprep.subr.bf16.mxu0 0
    %1485 = vmatpush1.bf16.msra.mxu0 %v1169
    %1486 = vmatprep.subr.bf16.mxu0 0
    %1487 = vmatpush1.bf16.msra.mxu0 %v1166
    %1488 = vmatprep.subr.bf16.mxu0 0
    %1489 = vmatpush1.bf16.msra.mxu0 %v1163
    %1490 = vmatprep.subr.bf16.mxu0 0
    %1491 = vmatpush1.bf16.msra.mxu0 %v1160
    %1492 = vmatprep.subr.bf16.mxu0 0
    %1493 = vmatpush1.bf16.msra.mxu0 %v1157
    %1494 = vmatprep.subr.bf16.mxu0 0
    %1495 = vmatpush1.bf16.msra.mxu0 %v1154
    %1496 = vmatprep.subr.bf16.mxu0 0
    %1497 = vmatpush1.bf16.msra.mxu0 %v1151
    %1498 = vmatprep.subr.bf16.mxu0 0
    %1499 = vmatpush1.bf16.msra.mxu0 %v1148
    %1500 = vmatprep.subr.bf16.mxu0 0
    %1501 = vmatpush2.bf16.msra.mxu0 %v1193
    %1502 = vmatprep.subr.bf16.mxu0 0
    %1503 = vmatpush2.bf16.msra.mxu0 %v1190
    %1504 = vmatprep.subr.bf16.mxu0 0
    %1505 = vmatpush2.bf16.msra.mxu0 %v1187
    %1506 = vmatprep.subr.bf16.mxu0 0
    %1507 = vmatpush2.bf16.msra.mxu0 %v1184
    %1508 = vmatprep.subr.bf16.mxu0 0
    %1509 = vmatpush2.bf16.msra.mxu0 %v1181
    %1510 = vmatprep.subr.bf16.mxu0 0
    %1511 = vmatpush2.bf16.msra.mxu0 %v1178
    %1512 = vmatprep.subr.bf16.mxu0 0
    %1513 = vmatpush2.bf16.msra.mxu0 %v1175
    %1514 = vmatprep.subr.bf16.mxu0 0
    %1515 = vmatpush2.bf16.msra.mxu0 %v1172
    %1516 = vmatprep.mubr.bf16.mxu0 %v353
    %1517 = vmatmul.mubr.bf16.gmra.mxu0 %v352
    %v1518 = vpop.f32.mrf.mxu0
    %v1519 = vadd.f32 %v796, %v1518
    %v1520 = vpop.f32.mrf.mxu0
    %v1521 = vpop.f32.mrf.mxu0
    %v1522 = vadd.f32 %v799, %v1521
    %v1523 = vpop.f32.mrf.mxu0
    %1524 = vmatprep.mubr.bf16.mxu0 %v357
    %1525 = vmatmul.mubr.bf16.gmra.mxu0 %v356
    %v1526 = vpop.f32.mrf.mxu0
    %v1527 = vadd.f32 %v804, %v1526
    %v1528 = vpop.f32.mrf.mxu0
    %v1529 = vpop.f32.mrf.mxu0
    %v1530 = vadd.f32 %v807, %v1529
    %v1531 = vpop.f32.mrf.mxu0
    %1532 = vmatprep.mubr.bf16.mxu0 %v361
    %1533 = vmatmul.mubr.bf16.gmra.mxu0 %v360
    %v1534 = vpop.f32.mrf.mxu0
    %v1535 = vadd.f32 %v812, %v1534
    %v1536 = vpop.f32.mrf.mxu0
    %v1537 = vpop.f32.mrf.mxu0
    %v1538 = vadd.f32 %v815, %v1537
    %v1539 = vpop.f32.mrf.mxu0
    %1540 = vmatprep.mubr.bf16.mxu0 %v365
    %1541 = vmatmul.mubr.bf16.gmra.mxu0 %v364
    %v1542 = vpop.f32.mrf.mxu0
    %v1543 = vadd.f32 %v820, %v1542
    %v1544 = vpop.f32.mrf.mxu0
    %v1545 = vpop.f32.mrf.mxu0
    %v1546 = vadd.f32 %v823, %v1545
    %v1547 = vpop.f32.mrf.mxu0
    %1548 = vdwg.mxu0
    %1549 = vmatprep.subr.bf16.mxu0 0
    %1550 = vmatpush1.bf16.msra.mxu0 %v1217
    %1551 = vmatprep.subr.bf16.mxu0 0
    %1552 = vmatpush1.bf16.msra.mxu0 %v1214
    %1553 = vmatprep.subr.bf16.mxu0 0
    %1554 = vmatpush1.bf16.msra.mxu0 %v1211
    %1555 = vmatprep.subr.bf16.mxu0 0
    %1556 = vmatpush1.bf16.msra.mxu0 %v1208
    %1557 = vmatprep.subr.bf16.mxu0 0
    %1558 = vmatpush1.bf16.msra.mxu0 %v1205
    %1559 = vmatprep.subr.bf16.mxu0 0
    %1560 = vmatpush1.bf16.msra.mxu0 %v1202
    %1561 = vmatprep.subr.bf16.mxu0 0
    %1562 = vmatpush1.bf16.msra.mxu0 %v1199
    %1563 = vmatprep.subr.bf16.mxu0 0
    %1564 = vmatpush1.bf16.msra.mxu0 %v1196
    %1565 = vmatprep.subr.bf16.mxu0 0
    %1566 = vmatpush2.bf16.msra.mxu0 %v1241
    %1567 = vmatprep.subr.bf16.mxu0 0
    %1568 = vmatpush2.bf16.msra.mxu0 %v1238
    %1569 = vmatprep.subr.bf16.mxu0 0
    %1570 = vmatpush2.bf16.msra.mxu0 %v1235
    %1571 = vmatprep.subr.bf16.mxu0 0
    %1572 = vmatpush2.bf16.msra.mxu0 %v1232
    %1573 = vmatprep.subr.bf16.mxu0 0
    %1574 = vmatpush2.bf16.msra.mxu0 %v1229
    %1575 = vmatprep.subr.bf16.mxu0 0
    %1576 = vmatpush2.bf16.msra.mxu0 %v1226
    %1577 = vmatprep.subr.bf16.mxu0 0
    %1578 = vmatpush2.bf16.msra.mxu0 %v1223
    %1579 = vmatprep.subr.bf16.mxu0 0
    %1580 = vmatpush2.bf16.msra.mxu0 %v1220
    %1581 = vmatprep.mubr.bf16.mxu0 %v355
    %1582 = vmatmul.mubr.bf16.gmra.mxu0 %v354
    %v1583 = vpop.f32.mrf.mxu0
    %v1584 = vadd.f32 %v1519, %v1583
    %v1585 = vpop.f32.mrf.mxu0
    %v1586 = vpop.f32.mrf.mxu0
    %v1587 = vadd.f32 %v1522, %v1586
    %v1588 = vpop.f32.mrf.mxu0
    %1589 = vmatprep.mubr.bf16.mxu0 %v359
    %1590 = vmatmul.mubr.bf16.gmra.mxu0 %v358
    %v1591 = vpop.f32.mrf.mxu0
    %v1592 = vadd.f32 %v1527, %v1591
    %v1593 = vpop.f32.mrf.mxu0
    %v1594 = vpop.f32.mrf.mxu0
    %v1595 = vadd.f32 %v1530, %v1594
    %v1596 = vpop.f32.mrf.mxu0
    %1597 = vmatprep.mubr.bf16.mxu0 %v363
    %1598 = vmatmul.mubr.bf16.gmra.mxu0 %v362
    %v1599 = vpop.f32.mrf.mxu0
    %v1600 = vadd.f32 %v1535, %v1599
    %v1601 = vpop.f32.mrf.mxu0
    %v1602 = vpop.f32.mrf.mxu0
    %v1603 = vadd.f32 %v1538, %v1602
    %v1604 = vpop.f32.mrf.mxu0
    %1605 = vmatprep.mubr.bf16.mxu0 %v367
    %1606 = vmatmul.mubr.bf16.gmra.mxu0 %v366
    %v1607 = vpop.f32.mrf.mxu0
    %v1608 = vadd.f32 %v1543, %v1607
    %v1609 = vpop.f32.mrf.mxu0
    %v1610 = vpop.f32.mrf.mxu0
    %v1611 = vadd.f32 %v1546, %v1610
    %v1612 = vpop.f32.mrf.mxu0
    %1613 = vdwg.mxu0
    %v1614 = vld [vmem:[%s6] sm:$0x7]
    %v1616 = vlaneseq
    %v1617 = vshrl.u32 %v1616, 7
    %v1618 = vsub.s32 0, %v1617
    %v1619 = vrot.slane %v1614, %v1618
    %v1620 = vlaneseq
    %v1621 = vshrl.u32 %v1620, 7
    %v1622 = vsub.s32 1, %v1621
    %v1623 = vrot.slane %v1614, %v1622
    %v1624 = vlaneseq
    %v1625 = vshrl.u32 %v1624, 7
    %v1626 = vsub.s32 2, %v1625
    %v1627 = vrot.slane %v1614, %v1626
    %v1631 = vadd.f32 %v1446, %v1619
    %v1632 = vadd.f32 %v1448, %v1623
    %v1633 = vadd.f32 %v1584, %v1627
    %v1634 = vadd.f32 %v1450, %v1619
    %v1635 = vadd.f32 %v1452, %v1623
    %v1636 = vadd.f32 %v1587, %v1627
    %v1637 = vadd.f32 %v1456, %v1619
    %v1638 = vadd.f32 %v1458, %v1623
    %v1639 = vadd.f32 %v1592, %v1627
    %v1640 = vadd.f32 %v1460, %v1619
    %v1641 = vadd.f32 %v1462, %v1623
    %v1642 = vadd.f32 %v1595, %v1627
    %v1643 = vadd.f32 %v1466, %v1619
    %v1644 = vadd.f32 %v1468, %v1623
    %v1645 = vadd.f32 %v1600, %v1627
    %v1646 = vadd.f32 %v1470, %v1619
    %v1647 = vadd.f32 %v1472, %v1623
    %v1648 = vadd.f32 %v1603, %v1627
    %v1649 = vadd.f32 %v1476, %v1619
    %v1650 = vadd.f32 %v1478, %v1623
    %v1651 = vadd.f32 %v1608, %v1627
    %v1652 = vadd.f32 %v1480, %v1619
    %v1653 = vadd.f32 %v1482, %v1623
    %v1654 = vadd.f32 %v1611, %v1627
    %v1655 = vmax.f32 %v1631, 0.0
    %v1656 = vmax.f32 %v1632, 0.0
    %v1657 = vmax.f32 %v1633, 0.0
    %v1658 = vmax.f32 %v1634, 0.0
    %v1659 = vmax.f32 %v1635, 0.0
    %v1660 = vmax.f32 %v1636, 0.0
    %v1661 = vmax.f32 %v1637, 0.0
    %v1662 = vmax.f32 %v1638, 0.0
    %v1663 = vmax.f32 %v1639, 0.0
    %v1664 = vmax.f32 %v1640, 0.0
    %v1665 = vmax.f32 %v1641, 0.0
    %v1666 = vmax.f32 %v1642, 0.0
    %v1667 = vmax.f32 %v1643, 0.0
    %v1668 = vmax.f32 %v1644, 0.0
    %v1669 = vmax.f32 %v1645, 0.0
    %v1670 = vmax.f32 %v1646, 0.0
    %v1671 = vmax.f32 %v1647, 0.0
    %v1672 = vmax.f32 %v1648, 0.0
    %v1673 = vmax.f32 %v1649, 0.0
    %v1674 = vmax.f32 %v1650, 0.0
    %v1675 = vmax.f32 %v1651, 0.0
    %v1676 = vmax.f32 %v1652, 0.0
    %v1677 = vmax.f32 %v1653, 0.0
    %v1678 = vmax.f32 %v1654, 0.0
    %v1679 = vld [vmem:[%s7] sm:$0x7]
    %v1681 = vlaneseq
    %v1682 = vshrl.u32 %v1681, 7
    %v1683 = vsub.s32 0, %v1682
    %v1684 = vrot.slane %v1679, %v1683
    %v1685 = vlaneseq
    %v1686 = vshrl.u32 %v1685, 7
    %v1687 = vsub.s32 1, %v1686
    %v1688 = vrot.slane %v1679, %v1687
    %v1689 = vlaneseq
    %v1690 = vshrl.u32 %v1689, 7
    %v1691 = vsub.s32 2, %v1690
    %v1692 = vrot.slane %v1679, %v1691
    %v1696 = vmul.f32 %v1655, %v1684
    %v1697 = vmul.f32 %v1656, %v1688
    %v1698 = vmul.f32 %v1657, %v1692
    %v1699 = vmul.f32 %v1658, %v1684
    %v1700 = vmul.f32 %v1659, %v1688
    %v1701 = vmul.f32 %v1660, %v1692
    %v1702 = vmul.f32 %v1661, %v1684
    %v1703 = vmul.f32 %v1662, %v1688
    %v1704 = vmul.f32 %v1663, %v1692
    %v1705 = vmul.f32 %v1664, %v1684
    %v1706 = vmul.f32 %v1665, %v1688
    %v1707 = vmul.f32 %v1666, %v1692
    %v1708 = vmul.f32 %v1667, %v1684
    %v1709 = vmul.f32 %v1668, %v1688
    %v1710 = vmul.f32 %v1669, %v1692
    %v1711 = vmul.f32 %v1670, %v1684
    %v1712 = vmul.f32 %v1671, %v1688
    %v1713 = vmul.f32 %v1672, %v1692
    %v1714 = vmul.f32 %v1673, %v1684
    %v1715 = vmul.f32 %v1674, %v1688
    %v1716 = vmul.f32 %v1675, %v1692
    %v1717 = vmul.f32 %v1676, %v1684
    %v1718 = vmul.f32 %v1677, %v1688
    %v1719 = vmul.f32 %v1678, %v1692
    %v1720 = vadd.f32 %v1696, %v1697
    %v1721 = vadd.f32 %v1720, %v1698
    %1722 = vadd.xlane.f32.xlu0 %v1721
    %v1723 = vpop.xlane.xlu0 %1722
    %v1724 = vadd.f32 %v1699, %v1700
    %v1725 = vadd.f32 %v1724, %v1701
    %1726 = vadd.xlane.f32.xlu0 %v1725
    %v1727 = vpop.xlane.xlu0 %1726
    %v1728 = vadd.f32 %v1702, %v1703
    %v1729 = vadd.f32 %v1728, %v1704
    %1730 = vadd.xlane.f32.xlu0 %v1729
    %v1731 = vpop.xlane.xlu0 %1730
    %v1732 = vadd.f32 %v1705, %v1706
    %v1733 = vadd.f32 %v1732, %v1707
    %1734 = vadd.xlane.f32.xlu0 %v1733
    %v1735 = vpop.xlane.xlu0 %1734
    %v1736 = vadd.f32 %v1708, %v1709
    %v1737 = vadd.f32 %v1736, %v1710
    %1738 = vadd.xlane.f32.xlu0 %v1737
    %v1739 = vpop.xlane.xlu0 %1738
    %v1740 = vadd.f32 %v1711, %v1712
    %v1741 = vadd.f32 %v1740, %v1713
    %1742 = vadd.xlane.f32.xlu0 %v1741
    %v1743 = vpop.xlane.xlu0 %1742
    %v1744 = vadd.f32 %v1714, %v1715
    %v1745 = vadd.f32 %v1744, %v1716
    %1746 = vadd.xlane.f32.xlu0 %v1745
    %v1747 = vpop.xlane.xlu0 %1746
    %v1748 = vadd.f32 %v1717, %v1718
    %v1749 = vadd.f32 %v1748, %v1719
    %1750 = vadd.xlane.f32.xlu0 %v1749
    %v1751 = vpop.xlane.xlu0 %1750
    %v1752 = vld [vmem:[#allocation2] sm:$0x1]
    %v1754 = vlaneseq
    %v1755 = vshrl.u32 %v1754, 7
    %v1756 = vsub.s32 0, %v1755
    %v1757 = vrot.slane %v1752, %v1756
    %v1759 = vadd.f32 %v1723, %v1757
    %v1760 = vadd.f32 %v1727, %v1757
    %v1761 = vadd.f32 %v1731, %v1757
    %v1762 = vadd.f32 %v1735, %v1757
    %v1763 = vadd.f32 %v1739, %v1757
    %v1764 = vadd.f32 %v1743, %v1757
    %v1765 = vadd.f32 %v1747, %v1757
    %v1766 = vadd.f32 %v1751, %v1757
    %vm1767 = vcmask 7168
    %1768 = vst.msk [vmem:[%s9] sm:$0xff] %vm1767, %v1759
    %1769 = vst.msk [vmem:[%s9 + $0x8] sm:$0xff] %vm1767, %v1760
    %1770 = vst.msk [vmem:[%s9 + $0x10] sm:$0xff] %vm1767, %v1761
    %1771 = vst.msk [vmem:[%s9 + $0x18] sm:$0xff] %vm1767, %v1762
    %1772 = vst.msk [vmem:[%s9 + $0x20] sm:$0xff] %vm1767, %v1763
    %1773 = vst.msk [vmem:[%s9 + $0x28] sm:$0xff] %vm1767, %v1764
    %1774 = vst.msk [vmem:[%s9 + $0x30] sm:$0xff] %vm1767, %v1765
    %1775 = vst.msk [vmem:[%s9 + $0x38] sm:$0xff] %vm1767, %v1766
    // Predicated region
    $region46: #{critic_forward.1} parent=1 // pred_check
      _
    $region47: #{critic_forward.1} parent=1 // pred_check_branch
      %1777 = sbr.rel (0) target = $region49
    $region48: #{critic_forward.1} parent=1 // pred_region
      _
    $region49: #{critic_forward.1} parent=1 // pred_fallthru
      _
    // Predicated region
    $region50: #{critic_forward.1} parent=1 // pred_check
      _
    $region51: #{critic_forward.1} parent=1 // pred_check_branch
      %1779 = sbr.rel (0) target = $region53
    $region52: #{critic_forward.1} parent=1 // pred_region
      _
    $region53: #{critic_forward.1} parent=1 // pred_fallthru
      _
    %1780 = vsyncpa [#allocation4], 1
    %1781 = vsyncpa [#allocation6], 1

</llo_original>
